<compile_context>
chip_gen: v7x
topology: tpu7x:2x2x1
jax: 0.10.0
libtpu: 0.0.40
codegen_flags: <defaults>
</compile_context>

<pallas_src>
import jax
import jax.numpy as jnp
from jax.experimental import pallas as pl
from jax.experimental.pallas import tpu as pltpu

# ------------------------- problem sizes (small) ----------------------------
B = 2            # batch
T = 32           # input time steps (multiple of 8 -> aligned batch slabs)
C_IN = 30        # input feature channels (fixed by the module)
C_H = 128        # hidden channels
NSPK = 8         # numSpkrs
K1, K2, DIL2 = 5, 5, 2
T1 = T - (K1 - 1)             # 28  valid frames after conv1
T2 = T1 - DIL2 * (K2 - 1)     # 20  valid frames after conv2
BT = B * T                    # 64  rows; batch b occupies rows [32b, 32b+32)
OUT_PAD = 128                 # lane-dense padded logits width

BN_EPS = 1e-5
BN_SCALE = 1.0 / (1.0 + BN_EPS) ** 0.5   # eval BN, running mean=0 var=1


# ------------------------------- kernel --------------------------------------
def _tdnn_kernel(x_ref, w1_ref, w2_ref, w3_ref, w4_ref, w5_ref, w6_ref,
                 bias_ref, out_ref):
    f32, bf16 = jnp.float32, jnp.bfloat16

    b1 = bias_ref[0:1, :]
    b2 = bias_ref[1:2, :]
    b3 = bias_ref[2:3, :]
    b4 = bias_ref[3:4, :]
    b5 = bias_ref[4:5, :]
    b6 = bias_ref[5:6, :]
    pool = bias_ref[6:8, 0:BT]                      # (B, 64): 1/T2 on valid rows

    zpad = jnp.zeros((16, C_H), bf16)               # shared shift padding

    # ---- tdnn1: Conv1d(30->128,k=5,d=1) as 5 accumulated K=128 matmuls ----
    # (x channels are zero-padded 30->128 in the wrapper; BN folded into w/b.)
    x = x_ref[...]                                  # (64, 128) bf16
    xpad = jnp.concatenate([x, zpad], axis=0)       # (80, 128)
    acc1 = jnp.dot(x, w1_ref[0:C_H, :], preferred_element_type=f32)
    for k in range(1, K1):
        acc1 = acc1 + jnp.dot(xpad[k:k + BT, :],
                              w1_ref[k * C_H:(k + 1) * C_H, :],
                              preferred_element_type=f32)
    h1 = jnp.maximum(acc1 + b1, 0.0).astype(bf16)   # (64, 128) = bn(relu(conv1))

    # ---- tdnn2: Conv1d(128->128,k=5,d=2): tap offsets 0,2,4,6,8 ----
    # Valid output rows (local t<20) only read valid h1 rows (t+8<=27) within
    # their own 32-row batch slab; padded/garbage rows never reach the stats.
    h1pad = jnp.concatenate([h1, zpad], axis=0)     # (80, 128)
    acc2 = jnp.dot(h1, w2_ref[0:C_H, :], preferred_element_type=f32)
    for k in range(1, K2):
        off = DIL2 * k
        acc2 = acc2 + jnp.dot(h1pad[off:off + BT, :],
                              w2_ref[k * C_H:(k + 1) * C_H, :],
                              preferred_element_type=f32)
    h2 = jnp.maximum(acc2 + b2, 0.0).astype(bf16)   # (64, 128)

    # ---- tdnn3: pointwise Conv1d(128->128,k=1); keep f32 for pooling ----
    h3 = jnp.maximum(jnp.dot(h2, w3_ref[...], preferred_element_type=f32) + b3,
                     0.0)                           # (64, 128) f32

    # ---- statistics pooling: fused [mean | E[x^2]] in ONE f32 matmul ----
    h3cat = jnp.concatenate([h3, h3 * h3], axis=-1)          # (64, 256)
    mm = jnp.dot(pool, h3cat, preferred_element_type=f32)    # (B, 256)
    mean = mm[:, :C_H]
    msq = mm[:, C_H:]
    var = jnp.maximum(msq - mean * mean, 0.0) * (T2 / (T2 - 1.0))  # unbiased
    stats = jnp.concatenate([mean, jnp.sqrt(var)], axis=-1).astype(bf16)

    # ---- fc1 / fc2 / fc3 (BN folded into fc1/fc2 weights & biases) ----
    z1 = jnp.maximum(jnp.dot(stats, w4_ref[...], preferred_element_type=f32)
                     + b4, 0.0).astype(bf16)                  # (B, 128)
    z2 = jnp.maximum(jnp.dot(z1, w5_ref[...], preferred_element_type=f32)
                     + b5, 0.0).astype(bf16)                  # (B, 128), cols>=64 zero
    out_ref[...] = jnp.dot(z2, w6_ref[...], preferred_element_type=f32) + b6


# ------------------------------ wrapper ---------------------------------------
def _const_spec(shape):
    return pl.BlockSpec(shape, lambda i: (0, 0))


@jax.jit
def simple_tdnn_forward(x_nct, params):
    """x_nct: (B, 30, T) float32 (PyTorch NCT layout). Returns (B, NSPK)."""
    (w1u, w2u, w3m, w4m, w5p, w6p, biases) = params

    # NCT -> NTC, zero-pad channels 30->128, flatten batch into sublanes.
    x = jnp.transpose(x_nct, (0, 2, 1)).astype(jnp.float32)      # (B, T, 30)
    x = jnp.pad(x, ((0, 0), (0, 0), (0, C_H - C_IN)))            # (B, T, 128)
    x = x.reshape(BT, C_H).astype(jnp.bfloat16)                  # (64, 128)

    operands = (x, w1u, w2u, w3m, w4m, w5p, w6p, biases)
    in_specs = [_const_spec(op.shape) for op in operands]

    out = pl.pallas_call(
        _tdnn_kernel,
        out_shape=jax.ShapeDtypeStruct((B, OUT_PAD), jnp.float32),
        grid_spec=pltpu.PrefetchScalarGridSpec(
            num_scalar_prefetch=0,
            grid=(1,),
            in_specs=in_specs,
            out_specs=pl.BlockSpec((B, OUT_PAD), lambda i: (0, 0)),
        ),
        compiler_params=pltpu.CompilerParams(
            dimension_semantics=("arbitrary",)),
    )(*operands)
    return out[:, :NSPK]


# --------------------------- parameter plumbing --------------------------------
def init_torch_params(key):
    """Synthetic parameters in the PyTorch module's native layouts."""
    ks = jax.random.split(key, 12)
    s = 0.05
    w1 = jax.random.normal(ks[0], (C_H, C_IN, K1), jnp.float32) * s   # (out,in,k)
    b1 = jax.random.normal(ks[1], (C_H,), jnp.float32) * s
    w2 = jax.random.normal(ks[2], (C_H, C_H, K2), jnp.float32) * s
    b2 = jax.random.normal(ks[3], (C_H,), jnp.float32) * s
    w3 = jax.random.normal(ks[4], (C_H, C_H, 1), jnp.float32) * s
    b3 = jax.random.normal(ks[5], (C_H,), jnp.float32) * s
    w4 = jax.random.normal(ks[6], (C_H, 2 * C_H), jnp.float32) * s     # (out,in)
    b4 = jax.random.normal(ks[7], (C_H,), jnp.float32) * s
    w5 = jax.random.normal(ks[8], (64, C_H), jnp.float32) * s
    b5 = jax.random.normal(ks[9], (64,), jnp.float32) * s
    w6 = jax.random.normal(ks[10], (NSPK, 64), jnp.float32) * s
    b6 = jax.random.normal(ks[11], (NSPK,), jnp.float32) * s
    return (w1, b1, w2, b2, w3, b3, w4, b4, w5, b5, w6, b6)


def pack_params(w1, b1, w2, b2, w3, b3, w4, b4, w5, b5, w6, b6):
    """Convert PyTorch-layout params into the kernel's packed bf16 layout.

    BN_SCALE (eval BatchNorm with running mean=0, var=1) is folded into every
    weight/bias that precedes a BN (ReLU commutes with a positive scale).
    Invariant: padded weight rows/cols and padded bias lanes are exact zeros,
    and the pooling rows are exact zeros on padded time rows.
    """
    bf16 = jnp.bfloat16
    s = BN_SCALE
    # conv taps stacked row-block-per-tap: rows [k*128, k*128+30) hold tap k.
    w1u = jnp.zeros((K1 * C_H, C_H), jnp.float32)
    for k in range(K1):
        w1u = w1u.at[k * C_H:k * C_H + C_IN, :].set(w1[:, :, k].T * s)
    w1u = w1u.astype(bf16)                                             # (640,128)
    w2u = (jnp.concatenate([w2[:, :, k].T for k in range(K2)], axis=0)
           * s).astype(bf16)                                           # (640,128)
    w3m = (w3[:, :, 0].T * s).astype(bf16)                             # (128,128)
    w4m = (w4.T * s).astype(bf16)                                      # (256,128)
    w5p = jnp.zeros((C_H, 128), jnp.float32).at[:, :64].set(w5.T * s).astype(bf16)
    w6p = jnp.zeros((128, 128), jnp.float32).at[:64, :NSPK].set(w6.T).astype(bf16)

    # biases + pooling matrix packed into one (8,128) f32 operand.
    biases = jnp.zeros((8, 128), jnp.float32)
    biases = biases.at[0, :].set(b1 * s).at[1, :].set(b2 * s).at[2, :].set(b3 * s)
    biases = biases.at[3, :].set(b4 * s)
    biases = biases.at[4, :64].set(b5 * s)
    biases = biases.at[5, :NSPK].set(b6)
    for b in range(B):
        biases = biases.at[6 + b, b * T: b * T + T2].set(1.0 / T2)
    return (w1u, w2u, w3m, w4m, w5p, w6p, biases)


# ---------------------------- pure-JAX reference --------------------------------
def reference_forward(x_nct, torch_params):
    (w1, b1, w2, b2, w3, b3, w4, b4, w5, b5, w6, b6) = torch_params
    x = jnp.transpose(x_nct, (0, 2, 1)).astype(jnp.float32)        # (B, T, C)

    def conv1d(x_btc, w_oik, b_o, dil):
        k = w_oik.shape[2]
        t_out = x_btc.shape[1] - dil * (k - 1)
        acc = jnp.zeros((x_btc.shape[0], t_out, w_oik.shape[0]), jnp.float32)
        for kk in range(k):
            acc = acc + jnp.einsum('btc,oc->bto',
                                   x_btc[:, kk * dil:kk * dil + t_out, :],
                                   w_oik[:, :, kk])
        return acc + b_o

    h = jnp.maximum(conv1d(x, w1, b1, 1), 0.0) * BN_SCALE
    h = jnp.maximum(conv1d(h, w2, b2, DIL2), 0.0) * BN_SCALE
    h = jnp.maximum(conv1d(h, w3, b3, 1), 0.0) * BN_SCALE
    mean = h.mean(axis=1)
    std = jnp.std(h, axis=1, ddof=1)
    stats = jnp.concatenate([mean, std], axis=-1)
    z = jnp.maximum(stats @ w4.T + b4, 0.0) * BN_SCALE
    z = jnp.maximum(z @ w5.T + b5, 0.0) * BN_SCALE
    return z @ w6.T + b6


# ----------------------------------- main ---------------------------------------
if __name__ == "__main__":
    key = jax.random.PRNGKey(0)
    k_x, k_p = jax.random.split(key)
    x_nct = jax.random.normal(k_x, (B, C_IN, T), jnp.float32)   # PyTorch NCT
    torch_params = init_torch_params(k_p)
    params = pack_params(*torch_params)

    logits = simple_tdnn_forward(x_nct, params)
    jax.block_until_ready(logits)
    assert logits.shape == (B, NSPK)
    assert bool(jnp.all(jnp.isfinite(logits)))

    ref = reference_forward(x_nct, torch_params)
    max_err = float(jnp.max(jnp.abs(logits - ref)))
    assert max_err < 3e-2, f"mismatch vs reference: max abs err = {max_err}"
    print("KERNEL_OK")
</pallas_src>

<mosaic_0001>
module attributes {stable_mosaic.version = 11 : i64} {
  func.func @_tdnn_kernel(%arg0: i32, %arg1: memref<64x128xbf16, #tpu.memory_space<vmem>>, %arg2: memref<640x128xbf16, #tpu.memory_space<vmem>>, %arg3: memref<640x128xbf16, #tpu.memory_space<vmem>>, %arg4: memref<128x128xbf16, #tpu.memory_space<vmem>>, %arg5: memref<256x128xbf16, #tpu.memory_space<vmem>>, %arg6: memref<128x128xbf16, #tpu.memory_space<vmem>>, %arg7: memref<128x128xbf16, #tpu.memory_space<vmem>>, %arg8: memref<8x128xf32, #tpu.memory_space<vmem>>, %arg9: memref<2x128xf32, #tpu.memory_space<vmem>>) attributes {dimension_semantics = [#tpu.dimension_semantics<arbitrary>], iteration_bounds = array<i64: 1>, scalar_prefetch = 0 : i64, scratch_operands = 0 : i64, tpu.core_type = #tpu.core_type<tc>, window_params = [{pipeline_mode = #tpu.pipeline_mode<synchronous>, transform_indices = @transform_0, window_bounds = array<i64: 64, 128>}, {pipeline_mode = #tpu.pipeline_mode<synchronous>, transform_indices = @transform_1, window_bounds = array<i64: 640, 128>}, {pipeline_mode = #tpu.pipeline_mode<synchronous>, transform_indices = @transform_2, window_bounds = array<i64: 640, 128>}, {pipeline_mode = #tpu.pipeline_mode<synchronous>, transform_indices = @transform_3, window_bounds = array<i64: 128, 128>}, {pipeline_mode = #tpu.pipeline_mode<synchronous>, transform_indices = @transform_4, window_bounds = array<i64: 256, 128>}, {pipeline_mode = #tpu.pipeline_mode<synchronous>, transform_indices = @transform_5, window_bounds = array<i64: 128, 128>}, {pipeline_mode = #tpu.pipeline_mode<synchronous>, transform_indices = @transform_6, window_bounds = array<i64: 128, 128>}, {pipeline_mode = #tpu.pipeline_mode<synchronous>, transform_indices = @transform_7, window_bounds = array<i64: 8, 128>}, {pipeline_mode = #tpu.pipeline_mode<synchronous>, transform_indices = @transform_8, window_bounds = array<i64: 2, 128>}]} {
    %c0 = arith.constant 0 : index
    %c0_0 = arith.constant 0 : index
    %0 = vector.load %arg8[%c0, %c0_0] : memref<8x128xf32, #tpu.memory_space<vmem>>, vector<1x128xf32>
    %c1 = arith.constant 1 : index
    %c0_1 = arith.constant 0 : index
    %1 = vector.load %arg8[%c1, %c0_1] : memref<8x128xf32, #tpu.memory_space<vmem>>, vector<1x128xf32>
    %c2 = arith.constant 2 : index
    %c0_2 = arith.constant 0 : index
    %2 = vector.load %arg8[%c2, %c0_2] : memref<8x128xf32, #tpu.memory_space<vmem>>, vector<1x128xf32>
    %c3 = arith.constant 3 : index
    %c0_3 = arith.constant 0 : index
    %3 = vector.load %arg8[%c3, %c0_3] : memref<8x128xf32, #tpu.memory_space<vmem>>, vector<1x128xf32>
    %c4 = arith.constant 4 : index
    %c0_4 = arith.constant 0 : index
    %4 = vector.load %arg8[%c4, %c0_4] : memref<8x128xf32, #tpu.memory_space<vmem>>, vector<1x128xf32>
    %c5 = arith.constant 5 : index
    %c0_5 = arith.constant 0 : index
    %5 = vector.load %arg8[%c5, %c0_5] : memref<8x128xf32, #tpu.memory_space<vmem>>, vector<1x128xf32>
    %c6 = arith.constant 6 : index
    %c0_6 = arith.constant 0 : index
    %6 = vector.load %arg8[%c6, %c0_6] : memref<8x128xf32, #tpu.memory_space<vmem>>, vector<2x64xf32>
    %cst = arith.constant 0.000000e+00 : bf16
    %7 = vector.broadcast %cst : bf16 to vector<16x128xbf16>
    %c0_7 = arith.constant 0 : index
    %c0_8 = arith.constant 0 : index
    %8 = vector.load %arg1[%c0_7, %c0_8] : memref<64x128xbf16, #tpu.memory_space<vmem>>, vector<64x128xbf16>
    %9 = tpu.concatenate %8, %7 in 0 : vector<64x128xbf16>, vector<16x128xbf16> -> vector<80x128xbf16>
    %c0_9 = arith.constant 0 : index
    %c0_10 = arith.constant 0 : index
    %10 = vector.load %arg2[%c0_9, %c0_10] : memref<640x128xbf16, #tpu.memory_space<vmem>>, vector<128x128xbf16>
    %cst_11 = arith.constant dense<0.000000e+00> : vector<64x128xf32>
    %11 = tpu.matmul %8, %10, %cst_11 {dimension_numbers = #tpu.dot_dimension_numbers<[1], [0], [0], [1], [0, 0, 1, 1], [], []>} : vector<64x128xbf16>, vector<128x128xbf16>, vector<64x128xf32> -> vector<64x128xf32>
    %12 = vector.extract_strided_slice %9 {offsets = [1, 0], sizes = [64, 128], strides = [1, 1]} : vector<80x128xbf16> to vector<64x128xbf16>
    %c128 = arith.constant 128 : index
    %c0_12 = arith.constant 0 : index
    %13 = vector.load %arg2[%c128, %c0_12] : memref<640x128xbf16, #tpu.memory_space<vmem>>, vector<128x128xbf16>
    %cst_13 = arith.constant dense<0.000000e+00> : vector<64x128xf32>
    %14 = tpu.matmul %12, %13, %cst_13 {dimension_numbers = #tpu.dot_dimension_numbers<[1], [0], [0], [1], [0, 0, 1, 1], [], []>} : vector<64x128xbf16>, vector<128x128xbf16>, vector<64x128xf32> -> vector<64x128xf32>
    %15 = arith.addf %11, %14 : vector<64x128xf32>
    %16 = vector.extract_strided_slice %9 {offsets = [2, 0], sizes = [64, 128], strides = [1, 1]} : vector<80x128xbf16> to vector<64x128xbf16>
    %c256 = arith.constant 256 : index
    %c0_14 = arith.constant 0 : index
    %17 = vector.load %arg2[%c256, %c0_14] : memref<640x128xbf16, #tpu.memory_space<vmem>>, vector<128x128xbf16>
    %cst_15 = arith.constant dense<0.000000e+00> : vector<64x128xf32>
    %18 = tpu.matmul %16, %17, %cst_15 {dimension_numbers = #tpu.dot_dimension_numbers<[1], [0], [0], [1], [0, 0, 1, 1], [], []>} : vector<64x128xbf16>, vector<128x128xbf16>, vector<64x128xf32> -> vector<64x128xf32>
    %19 = arith.addf %15, %18 : vector<64x128xf32>
    %20 = vector.extract_strided_slice %9 {offsets = [3, 0], sizes = [64, 128], strides = [1, 1]} : vector<80x128xbf16> to vector<64x128xbf16>
    %c384 = arith.constant 384 : index
    %c0_16 = arith.constant 0 : index
    %21 = vector.load %arg2[%c384, %c0_16] : memref<640x128xbf16, #tpu.memory_space<vmem>>, vector<128x128xbf16>
    %cst_17 = arith.constant dense<0.000000e+00> : vector<64x128xf32>
    %22 = tpu.matmul %20, %21, %cst_17 {dimension_numbers = #tpu.dot_dimension_numbers<[1], [0], [0], [1], [0, 0, 1, 1], [], []>} : vector<64x128xbf16>, vector<128x128xbf16>, vector<64x128xf32> -> vector<64x128xf32>
    %23 = arith.addf %19, %22 : vector<64x128xf32>
    %24 = vector.extract_strided_slice %9 {offsets = [4, 0], sizes = [64, 128], strides = [1, 1]} : vector<80x128xbf16> to vector<64x128xbf16>
    %c512 = arith.constant 512 : index
    %c0_18 = arith.constant 0 : index
    %25 = vector.load %arg2[%c512, %c0_18] : memref<640x128xbf16, #tpu.memory_space<vmem>>, vector<128x128xbf16>
    %cst_19 = arith.constant dense<0.000000e+00> : vector<64x128xf32>
    %26 = tpu.matmul %24, %25, %cst_19 {dimension_numbers = #tpu.dot_dimension_numbers<[1], [0], [0], [1], [0, 0, 1, 1], [], []>} : vector<64x128xbf16>, vector<128x128xbf16>, vector<64x128xf32> -> vector<64x128xf32>
    %27 = arith.addf %23, %26 : vector<64x128xf32>
    %28 = vector.broadcast %0 : vector<1x128xf32> to vector<64x128xf32>
    %29 = arith.addf %27, %28 : vector<64x128xf32>
    %cst_20 = arith.constant 0.000000e+00 : f32
    %30 = vector.broadcast %cst_20 : f32 to vector<64x128xf32>
    %31 = arith.maximumf %29, %30 : vector<64x128xf32>
    %32 = arith.truncf %31 : vector<64x128xf32> to vector<64x128xbf16>
    %33 = tpu.concatenate %32, %7 in 0 : vector<64x128xbf16>, vector<16x128xbf16> -> vector<80x128xbf16>
    %c0_21 = arith.constant 0 : index
    %c0_22 = arith.constant 0 : index
    %34 = vector.load %arg3[%c0_21, %c0_22] : memref<640x128xbf16, #tpu.memory_space<vmem>>, vector<128x128xbf16>
    %cst_23 = arith.constant dense<0.000000e+00> : vector<64x128xf32>
    %35 = tpu.matmul %32, %34, %cst_23 {dimension_numbers = #tpu.dot_dimension_numbers<[1], [0], [0], [1], [0, 0, 1, 1], [], []>} : vector<64x128xbf16>, vector<128x128xbf16>, vector<64x128xf32> -> vector<64x128xf32>
    %36 = vector.extract_strided_slice %33 {offsets = [2, 0], sizes = [64, 128], strides = [1, 1]} : vector<80x128xbf16> to vector<64x128xbf16>
    %c128_24 = arith.constant 128 : index
    %c0_25 = arith.constant 0 : index
    %37 = vector.load %arg3[%c128_24, %c0_25] : memref<640x128xbf16, #tpu.memory_space<vmem>>, vector<128x128xbf16>
    %cst_26 = arith.constant dense<0.000000e+00> : vector<64x128xf32>
    %38 = tpu.matmul %36, %37, %cst_26 {dimension_numbers = #tpu.dot_dimension_numbers<[1], [0], [0], [1], [0, 0, 1, 1], [], []>} : vector<64x128xbf16>, vector<128x128xbf16>, vector<64x128xf32> -> vector<64x128xf32>
    %39 = arith.addf %35, %38 : vector<64x128xf32>
    %40 = vector.extract_strided_slice %33 {offsets = [4, 0], sizes = [64, 128], strides = [1, 1]} : vector<80x128xbf16> to vector<64x128xbf16>
    %c256_27 = arith.constant 256 : index
    %c0_28 = arith.constant 0 : index
    %41 = vector.load %arg3[%c256_27, %c0_28] : memref<640x128xbf16, #tpu.memory_space<vmem>>, vector<128x128xbf16>
    %cst_29 = arith.constant dense<0.000000e+00> : vector<64x128xf32>
    %42 = tpu.matmul %40, %41, %cst_29 {dimension_numbers = #tpu.dot_dimension_numbers<[1], [0], [0], [1], [0, 0, 1, 1], [], []>} : vector<64x128xbf16>, vector<128x128xbf16>, vector<64x128xf32> -> vector<64x128xf32>
    %43 = arith.addf %39, %42 : vector<64x128xf32>
    %44 = vector.extract_strided_slice %33 {offsets = [6, 0], sizes = [64, 128], strides = [1, 1]} : vector<80x128xbf16> to vector<64x128xbf16>
    %c384_30 = arith.constant 384 : index
    %c0_31 = arith.constant 0 : index
    %45 = vector.load %arg3[%c384_30, %c0_31] : memref<640x128xbf16, #tpu.memory_space<vmem>>, vector<128x128xbf16>
    %cst_32 = arith.constant dense<0.000000e+00> : vector<64x128xf32>
    %46 = tpu.matmul %44, %45, %cst_32 {dimension_numbers = #tpu.dot_dimension_numbers<[1], [0], [0], [1], [0, 0, 1, 1], [], []>} : vector<64x128xbf16>, vector<128x128xbf16>, vector<64x128xf32> -> vector<64x128xf32>
    %47 = arith.addf %43, %46 : vector<64x128xf32>
    %48 = vector.extract_strided_slice %33 {offsets = [8, 0], sizes = [64, 128], strides = [1, 1]} : vector<80x128xbf16> to vector<64x128xbf16>
    %c512_33 = arith.constant 512 : index
    %c0_34 = arith.constant 0 : index
    %49 = vector.load %arg3[%c512_33, %c0_34] : memref<640x128xbf16, #tpu.memory_space<vmem>>, vector<128x128xbf16>
    %cst_35 = arith.constant dense<0.000000e+00> : vector<64x128xf32>
    %50 = tpu.matmul %48, %49, %cst_35 {dimension_numbers = #tpu.dot_dimension_numbers<[1], [0], [0], [1], [0, 0, 1, 1], [], []>} : vector<64x128xbf16>, vector<128x128xbf16>, vector<64x128xf32> -> vector<64x128xf32>
    %51 = arith.addf %47, %50 : vector<64x128xf32>
    %52 = vector.broadcast %1 : vector<1x128xf32> to vector<64x128xf32>
    %53 = arith.addf %51, %52 : vector<64x128xf32>
    %cst_36 = arith.constant 0.000000e+00 : f32
    %54 = vector.broadcast %cst_36 : f32 to vector<64x128xf32>
    %55 = arith.maximumf %53, %54 : vector<64x128xf32>
    %56 = arith.truncf %55 : vector<64x128xf32> to vector<64x128xbf16>
    %c0_37 = arith.constant 0 : index
    %c0_38 = arith.constant 0 : index
    %57 = vector.load %arg4[%c0_37, %c0_38] : memref<128x128xbf16, #tpu.memory_space<vmem>>, vector<128x128xbf16>
    %cst_39 = arith.constant dense<0.000000e+00> : vector<64x128xf32>
    %58 = tpu.matmul %56, %57, %cst_39 {dimension_numbers = #tpu.dot_dimension_numbers<[1], [0], [0], [1], [0, 0, 1, 1], [], []>} : vector<64x128xbf16>, vector<128x128xbf16>, vector<64x128xf32> -> vector<64x128xf32>
    %59 = vector.broadcast %2 : vector<1x128xf32> to vector<64x128xf32>
    %60 = arith.addf %58, %59 : vector<64x128xf32>
    %cst_40 = arith.constant 0.000000e+00 : f32
    %61 = vector.broadcast %cst_40 : f32 to vector<64x128xf32>
    %62 = arith.maximumf %60, %61 : vector<64x128xf32>
    %63 = arith.mulf %62, %62 : vector<64x128xf32>
    %64 = tpu.concatenate %62, %63 in 1 : vector<64x128xf32>, vector<64x128xf32> -> vector<64x256xf32>
    %cst_41 = arith.constant dense<0.000000e+00> : vector<2x256xf32>
    %65 = tpu.matmul %6, %64, %cst_41 {dimension_numbers = #tpu.dot_dimension_numbers<[1], [0], [0], [1], [0, 0, 1, 1], [], []>} : vector<2x64xf32>, vector<64x256xf32>, vector<2x256xf32> -> vector<2x256xf32>
    %66 = vector.extract_strided_slice %65 {offsets = [0, 0], sizes = [2, 128], strides = [1, 1]} : vector<2x256xf32> to vector<2x128xf32>
    %67 = vector.extract_strided_slice %65 {offsets = [0, 128], sizes = [2, 128], strides = [1, 1]} : vector<2x256xf32> to vector<2x128xf32>
    %68 = arith.mulf %66, %66 : vector<2x128xf32>
    %69 = arith.subf %67, %68 : vector<2x128xf32>
    %cst_42 = arith.constant 0.000000e+00 : f32
    %70 = vector.broadcast %cst_42 : f32 to vector<2x128xf32>
    %71 = arith.maximumf %69, %70 : vector<2x128xf32>
    %cst_43 = arith.constant 1.05263162 : f32
    %72 = vector.broadcast %cst_43 : f32 to vector<2x128xf32>
    %73 = arith.mulf %71, %72 : vector<2x128xf32>
    %74 = math.sqrt %73 : vector<2x128xf32>
    %75 = tpu.concatenate %66, %74 in 1 : vector<2x128xf32>, vector<2x128xf32> -> vector<2x256xf32>
    %76 = arith.truncf %75 : vector<2x256xf32> to vector<2x256xbf16>
    %c0_44 = arith.constant 0 : index
    %c0_45 = arith.constant 0 : index
    %77 = vector.load %arg5[%c0_44, %c0_45] : memref<256x128xbf16, #tpu.memory_space<vmem>>, vector<256x128xbf16>
    %cst_46 = arith.constant dense<0.000000e+00> : vector<2x128xf32>
    %78 = tpu.matmul %76, %77, %cst_46 {dimension_numbers = #tpu.dot_dimension_numbers<[1], [0], [0], [1], [0, 0, 1, 1], [], []>} : vector<2x256xbf16>, vector<256x128xbf16>, vector<2x128xf32> -> vector<2x128xf32>
    %79 = vector.broadcast %3 : vector<1x128xf32> to vector<2x128xf32>
    %80 = arith.addf %78, %79 : vector<2x128xf32>
    %cst_47 = arith.constant 0.000000e+00 : f32
    %81 = vector.broadcast %cst_47 : f32 to vector<2x128xf32>
    %82 = arith.maximumf %80, %81 : vector<2x128xf32>
    %83 = arith.truncf %82 : vector<2x128xf32> to vector<2x128xbf16>
    %c0_48 = arith.constant 0 : index
    %c0_49 = arith.constant 0 : index
    %84 = vector.load %arg6[%c0_48, %c0_49] : memref<128x128xbf16, #tpu.memory_space<vmem>>, vector<128x128xbf16>
    %cst_50 = arith.constant dense<0.000000e+00> : vector<2x128xf32>
    %85 = tpu.matmul %83, %84, %cst_50 {dimension_numbers = #tpu.dot_dimension_numbers<[1], [0], [0], [1], [0, 0, 1, 1], [], []>} : vector<2x128xbf16>, vector<128x128xbf16>, vector<2x128xf32> -> vector<2x128xf32>
    %86 = vector.broadcast %4 : vector<1x128xf32> to vector<2x128xf32>
    %87 = arith.addf %85, %86 : vector<2x128xf32>
    %cst_51 = arith.constant 0.000000e+00 : f32
    %88 = vector.broadcast %cst_51 : f32 to vector<2x128xf32>
    %89 = arith.maximumf %87, %88 : vector<2x128xf32>
    %90 = arith.truncf %89 : vector<2x128xf32> to vector<2x128xbf16>
    %c0_52 = arith.constant 0 : index
    %c0_53 = arith.constant 0 : index
    %91 = vector.load %arg7[%c0_52, %c0_53] : memref<128x128xbf16, #tpu.memory_space<vmem>>, vector<128x128xbf16>
    %cst_54 = arith.constant dense<0.000000e+00> : vector<2x128xf32>
    %92 = tpu.matmul %90, %91, %cst_54 {dimension_numbers = #tpu.dot_dimension_numbers<[1], [0], [0], [1], [0, 0, 1, 1], [], []>} : vector<2x128xbf16>, vector<128x128xbf16>, vector<2x128xf32> -> vector<2x128xf32>
    %93 = vector.broadcast %5 : vector<1x128xf32> to vector<2x128xf32>
    %94 = arith.addf %92, %93 : vector<2x128xf32>
    %c0_55 = arith.constant 0 : index
    %c0_56 = arith.constant 0 : index
    %95 = vector.load %arg9[%c0_55, %c0_56] : memref<2x128xf32, #tpu.memory_space<vmem>>, vector<2x128xf32>
    tpu.vector_store %arg9[%c0_55, %c0_56], %94 {strides = array<i32>} : memref<2x128xf32, #tpu.memory_space<vmem>>, vector<2x128xf32>,
    return
  }
  func.func @transform_0(%arg0: i32) -> (i32, i32) {
    %c0_i32 = arith.constant 0 : i32
    %c0_i32_0 = arith.constant 0 : i32
    %c0_i32_1 = arith.constant 0 : i32
    return %c0_i32, %c0_i32_0 : i32, i32
  }
  func.func @transform_1(%arg0: i32) -> (i32, i32) {
    %c0_i32 = arith.constant 0 : i32
    %c0_i32_0 = arith.constant 0 : i32
    %c0_i32_1 = arith.constant 0 : i32
    return %c0_i32, %c0_i32_0 : i32, i32
  }
  func.func @transform_2(%arg0: i32) -> (i32, i32) {
    %c0_i32 = arith.constant 0 : i32
    %c0_i32_0 = arith.constant 0 : i32
    %c0_i32_1 = arith.constant 0 : i32
    return %c0_i32, %c0_i32_0 : i32, i32
  }
  func.func @transform_3(%arg0: i32) -> (i32, i32) {
    %c0_i32 = arith.constant 0 : i32
    %c0_i32_0 = arith.constant 0 : i32
    %c0_i32_1 = arith.constant 0 : i32
    return %c0_i32, %c0_i32_0 : i32, i32
  }
  func.func @transform_4(%arg0: i32) -> (i32, i32) {
    %c0_i32 = arith.constant 0 : i32
    %c0_i32_0 = arith.constant 0 : i32
    %c0_i32_1 = arith.constant 0 : i32
    return %c0_i32, %c0_i32_0 : i32, i32
  }
  func.func @transform_5(%arg0: i32) -> (i32, i32) {
    %c0_i32 = arith.constant 0 : i32
    %c0_i32_0 = arith.constant 0 : i32
    %c0_i32_1 = arith.constant 0 : i32
    return %c0_i32, %c0_i32_0 : i32, i32
  }
  func.func @transform_6(%arg0: i32) -> (i32, i32) {
    %c0_i32 = arith.constant 0 : i32
    %c0_i32_0 = arith.constant 0 : i32
    %c0_i32_1 = arith.constant 0 : i32
    return %c0_i32, %c0_i32_0 : i32, i32
  }
  func.func @transform_7(%arg0: i32) -> (i32, i32) {
    %c0_i32 = arith.constant 0 : i32
    %c0_i32_0 = arith.constant 0 : i32
    %c0_i32_1 = arith.constant 0 : i32
    return %c0_i32, %c0_i32_0 : i32, i32
  }
  func.func @transform_8(%arg0: i32) -> (i32, i32) {
    %c0_i32 = arith.constant 0 : i32
    %c0_i32_0 = arith.constant 0 : i32
    %c0_i32_1 = arith.constant 0 : i32
    return %c0_i32, %c0_i32_0 : i32, i32
  }
}

</mosaic_0001>

<llo_original>
// kernel: simple_tdnn_forward.1
$region0: #{simple_tdnn_forward.1}
  #allocation0 [shape = 'u32[]', space=smem, size = 0x4, offset = 0x4, fixed_abs, tag = 'smem constant byte address 0x4 - core index']
  #allocation1 [shape = 'u32[144,128]{1,0:T(1,128)}', space=vmem, size = 0x12000, scoped, tag = 'internal scratch']
  %s0 = inlined_call_operand.vmem [shape: bf16[64,128], index: 0, kind: input, shape index: {}]
  %s1 = inlined_call_operand.hbm [shape: bf16[640,128], index: 1, kind: input, shape index: {}]
  %s2 = inlined_call_operand.hbm [shape: bf16[640,128], index: 2, kind: input, shape index: {}]
  %s3 = inlined_call_operand.vmem [shape: bf16[128,128], index: 3, kind: input, shape index: {}]
  %s4 = inlined_call_operand.vmem [shape: bf16[256,128], index: 4, kind: input, shape index: {}]
  %s5 = inlined_call_operand.hbm [shape: bf16[128,128], index: 5, kind: input, shape index: {}]
  %s6 = inlined_call_operand.hbm [shape: bf16[128,128], index: 6, kind: input, shape index: {}]
  %s7 = inlined_call_operand.vmem [shape: f32[8,128], index: 7, kind: input, shape index: {}]
  %s8 = inlined_call_operand.hbm [shape: f32[2,128], index: 8, kind: output, shape index: {}]
  %s9 = sld [smem:[#allocation0]]
  $region58: #{simple_tdnn_forward.1} parent=0
    _
  %s11 = ssub.s32 1, %s9
  %s12 = scalar_select 0, %s11, %s9
  $region1: #{simple_tdnn_forward.1} parent=0
    #allocation2 [shape = 'u8[163840]{0}', space=vmem, size = 0x28000, scoped, tag = 'input window, operand 1, single buffered']
    #allocation3 [shape = 's32[1]{0}', space=sflag, size = 0x4, scoped, tag = 'scoped memory for simple_tdnn_forward.1']
    #allocation4 [shape = 's32[1]{0}', space=sflag, size = 0x4, scoped, tag = 'scoped memory for simple_tdnn_forward.1']
    #allocation5 [shape = 'u8[163840]{0}', space=vmem, size = 0x28000, scoped, tag = 'input window, operand 2, single buffered']
    #allocation6 [shape = 's32[1]{0}', space=sflag, size = 0x4, scoped, tag = 'scoped memory for simple_tdnn_forward.1']
    #allocation7 [shape = 'u8[32768]{0}', space=vmem, size = 0x8000, scoped, tag = 'input window, operand 5, single buffered']
    #allocation8 [shape = 'u8[32768]{0}', space=vmem, size = 0x8000, scoped, tag = 'input window, operand 6, single buffered']
    #allocation9 [shape = 's32[1]{0}', space=sflag, size = 0x4, scoped, tag = 'scoped memory for simple_tdnn_forward.1']
    #allocation10 [shape = 'u8[1024]{0}', space=vmem, size = 0x400, scoped, tag = 'output window, operand 0, single buffered']
    %13 = vsyncpa [#allocation3], 0
    %14 = vsyncpa [#allocation6], 0
    %15 = vsyncpa [#allocation9], 0
    %16 = vsyncpa [#allocation4], 0
    // Predicated region
    $region2: #{simple_tdnn_forward.1} parent=1 // pred_check
      _
    $region3: #{simple_tdnn_forward.1} parent=1 // pred_check_branch
      %18 = sbr.rel (0) target = $region5
    $region4: #{simple_tdnn_forward.1} parent=1 // pred_region
      _
    $region5: #{simple_tdnn_forward.1} parent=1 // pred_fallthru
      _
    // Predicated region
    $region6: #{simple_tdnn_forward.1} parent=1 // pred_check
      _
    $region7: #{simple_tdnn_forward.1} parent=1 // pred_check_branch
      %20 = sbr.rel (0) target = $region9
    $region8: #{simple_tdnn_forward.1} parent=1 // pred_region
      %s22 = ssub.s32 5120, 5120
      %23 = vsyncadd [#allocation3], %s22
      %s24 = sshll.u32 [#allocation2], 4
      %s25 = int_to_ptr.vmem [resolvable:$true] %s24
      %30 = dma.hbm_to_vmem [thread:$0]  %s1, 5120, %s25, [#allocation3], 64, 64, 4
    $region9: #{simple_tdnn_forward.1} parent=1 // pred_fallthru
      _
    // Predicated region
    $region10: #{simple_tdnn_forward.1} parent=1 // pred_check
      _
    $region11: #{simple_tdnn_forward.1} parent=1 // pred_check_branch
      %32 = sbr.rel (0) target = $region13
    $region12: #{simple_tdnn_forward.1} parent=1 // pred_region
      %s34 = ssub.s32 5120, 5120
      %35 = vsyncadd [#allocation6], %s34
      %s36 = sshll.u32 [#allocation5], 4
      %s37 = int_to_ptr.vmem [resolvable:$true] %s36
      %42 = dma.hbm_to_vmem [thread:$0]  %s2, 5120, %s37, [#allocation6], 64, 64, 4
    $region13: #{simple_tdnn_forward.1} parent=1 // pred_fallthru
      _
    // Predicated region
    $region14: #{simple_tdnn_forward.1} parent=1 // pred_check
      _
    $region15: #{simple_tdnn_forward.1} parent=1 // pred_check_branch
      %44 = sbr.rel (0) target = $region17
    $region16: #{simple_tdnn_forward.1} parent=1 // pred_region
      _
    $region17: #{simple_tdnn_forward.1} parent=1 // pred_fallthru
      _
    // Predicated region
    $region18: #{simple_tdnn_forward.1} parent=1 // pred_check
      _
    $region19: #{simple_tdnn_forward.1} parent=1 // pred_check_branch
      %46 = sbr.rel (0) target = $region21
    $region20: #{simple_tdnn_forward.1} parent=1 // pred_region
      _
    $region21: #{simple_tdnn_forward.1} parent=1 // pred_fallthru
      _
    // Predicated region
    $region22: #{simple_tdnn_forward.1} parent=1 // pred_check
      _
    $region23: #{simple_tdnn_forward.1} parent=1 // pred_check_branch
      %48 = sbr.rel (0) target = $region25
    $region24: #{simple_tdnn_forward.1} parent=1 // pred_region
      %s50 = ssub.s32 1024, 1024
      %51 = vsyncadd [#allocation6], %s50
      %s52 = sshll.u32 [#allocation7], 4
      %s53 = int_to_ptr.vmem [resolvable:$true] %s52
      %58 = dma.hbm_to_vmem [thread:$0]  %s5, 1024, %s53, [#allocation6], 64, 64, 4
    $region25: #{simple_tdnn_forward.1} parent=1 // pred_fallthru
      _
    // Predicated region
    $region26: #{simple_tdnn_forward.1} parent=1 // pred_check
      _
    $region27: #{simple_tdnn_forward.1} parent=1 // pred_check_branch
      %60 = sbr.rel (0) target = $region29
    $region28: #{simple_tdnn_forward.1} parent=1 // pred_region
      %s62 = ssub.s32 1024, 1024
      %63 = vsyncadd [#allocation9], %s62
      %s64 = sshll.u32 [#allocation8], 4
      %s65 = int_to_ptr.vmem [resolvable:$true] %s64
      %70 = dma.hbm_to_vmem [thread:$0]  %s6, 1024, %s65, [#allocation9], 64, 64, 4
    $region29: #{simple_tdnn_forward.1} parent=1 // pred_fallthru
      _
    // Predicated region
    $region30: #{simple_tdnn_forward.1} parent=1 // pred_check
      _
    $region31: #{simple_tdnn_forward.1} parent=1 // pred_check_branch
      %72 = sbr.rel (0) target = $region33
    $region32: #{simple_tdnn_forward.1} parent=1 // pred_region
      _
    $region33: #{simple_tdnn_forward.1} parent=1 // pred_fallthru
      _
    // Predicated region
    $region34: #{simple_tdnn_forward.1} parent=1 // pred_check
      _
    $region35: #{simple_tdnn_forward.1} parent=1 // pred_check_branch
      %74 = sbr.rel (0) target = $region37
    $region36: #{simple_tdnn_forward.1} parent=1 // pred_region
      %75 = dma.done [#allocation3], 5120
    $region37: #{simple_tdnn_forward.1} parent=1 // pred_fallthru
      _
    // Predicated region
    $region38: #{simple_tdnn_forward.1} parent=1 // pred_check
      _
    $region39: #{simple_tdnn_forward.1} parent=1 // pred_check_branch
      %77 = sbr.rel (0) target = $region41
    $region40: #{simple_tdnn_forward.1} parent=1 // pred_region
      %78 = dma.done [#allocation6], 5120
    $region41: #{simple_tdnn_forward.1} parent=1 // pred_fallthru
      _
    // Predicated region
    $region42: #{simple_tdnn_forward.1} parent=1 // pred_check
      _
    $region43: #{simple_tdnn_forward.1} parent=1 // pred_check_branch
      %80 = sbr.rel (0) target = $region45
    $region44: #{simple_tdnn_forward.1} parent=1 // pred_region
      %81 = dma.done [#allocation6], 1024
    $region45: #{simple_tdnn_forward.1} parent=1 // pred_fallthru
      _
    // Predicated region
    $region46: #{simple_tdnn_forward.1} parent=1 // pred_check
      _
    $region47: #{simple_tdnn_forward.1} parent=1 // pred_check_branch
      %83 = sbr.rel (0) target = $region49
    $region48: #{simple_tdnn_forward.1} parent=1 // pred_region
      %84 = dma.done [#allocation9], 1024
    $region49: #{simple_tdnn_forward.1} parent=1 // pred_fallthru
      _
    %v86 = vld [vmem:[%s7] sm:$0x1]
    %v87 = vld [vmem:[%s7 + $0x1] sm:$0x1]
    %v88 = vld [vmem:[%s7 + $0x2] sm:$0x1]
    %v89 = vld [vmem:[%s7 + $0x3] sm:$0x1]
    %v90 = vld [vmem:[%s7 + $0x4] sm:$0x1]
    %v91 = vld [vmem:[%s7 + $0x5] sm:$0x1]
    %v92 = vld [vmem:[%s7 + $0x6] sm:$0x3]
    %v93 = vld [vmem:[%s0] sm:$0xf]
    %v94 = vld [vmem:[%s0 + $0x4] sm:$0xf]
    %v95 = vld [vmem:[%s0 + $0x8] sm:$0xf]
    %v96 = vld [vmem:[%s0 + $0xc] sm:$0xf]
    %v97 = vld [vmem:[%s0 + $0x10] sm:$0xf]
    %v98 = vld [vmem:[%s0 + $0x14] sm:$0xf]
    %v99 = vld [vmem:[%s0 + $0x18] sm:$0xf]
    %v100 = vld [vmem:[%s0 + $0x1c] sm:$0xf]
    %v109 = vunpack.c.l.b16 %v93
    %v110 = vunpack.c.l.b16 %v94
    %v111 = vunpack.c.l.b16 %v95
    %v112 = vunpack.c.l.b16 %v96
    %v113 = vunpack.c.l.b16 %v97
    %v114 = vunpack.c.l.b16 %v98
    %v115 = vunpack.c.l.b16 %v99
    %v116 = vunpack.c.l.b16 %v100
    %v117 = vpack.c.b16 %v110, %v109
    %v118 = vpack.c.b16 %v112, %v111
    %v119 = vpack.c.b16 %v114, %v113
    %v120 = vpack.c.b16 %v116, %v115
    %v121 = vld [vmem:[#allocation2] sm:$0xf]
    %v122 = vld [vmem:[#allocation2 + $0x4] sm:$0xf]
    %v123 = vld [vmem:[#allocation2 + $0x8] sm:$0xf]
    %v124 = vld [vmem:[#allocation2 + $0xc] sm:$0xf]
    %v125 = vld [vmem:[#allocation2 + $0x10] sm:$0xf]
    %v126 = vld [vmem:[#allocation2 + $0x14] sm:$0xf]
    %v127 = vld [vmem:[#allocation2 + $0x18] sm:$0xf]
    %v128 = vld [vmem:[#allocation2 + $0x1c] sm:$0xf]
    %v129 = vld [vmem:[#allocation2 + $0x20] sm:$0xf]
    %v130 = vld [vmem:[#allocation2 + $0x24] sm:$0xf]
    %v131 = vld [vmem:[#allocation2 + $0x28] sm:$0xf]
    %v132 = vld [vmem:[#allocation2 + $0x2c] sm:$0xf]
    %v133 = vld [vmem:[#allocation2 + $0x30] sm:$0xf]
    %v134 = vld [vmem:[#allocation2 + $0x34] sm:$0xf]
    %v135 = vld [vmem:[#allocation2 + $0x38] sm:$0xf]
    %v136 = vld [vmem:[#allocation2 + $0x3c] sm:$0xf]
    %v137 = vld [vmem:[#allocation2 + $0x40] sm:$0xf]
    %v138 = vld [vmem:[#allocation2 + $0x44] sm:$0xf]
    %v139 = vld [vmem:[#allocation2 + $0x48] sm:$0xf]
    %v140 = vld [vmem:[#allocation2 + $0x4c] sm:$0xf]
    %v141 = vld [vmem:[#allocation2 + $0x50] sm:$0xf]
    %v142 = vld [vmem:[#allocation2 + $0x54] sm:$0xf]
    %v143 = vld [vmem:[#allocation2 + $0x58] sm:$0xf]
    %v144 = vld [vmem:[#allocation2 + $0x5c] sm:$0xf]
    %v145 = vld [vmem:[#allocation2 + $0x60] sm:$0xf]
    %v146 = vld [vmem:[#allocation2 + $0x64] sm:$0xf]
    %v147 = vld [vmem:[#allocation2 + $0x68] sm:$0xf]
    %v148 = vld [vmem:[#allocation2 + $0x6c] sm:$0xf]
    %v149 = vld [vmem:[#allocation2 + $0x70] sm:$0xf]
    %v150 = vld [vmem:[#allocation2 + $0x74] sm:$0xf]
    %v151 = vld [vmem:[#allocation2 + $0x78] sm:$0xf]
    %v152 = vld [vmem:[#allocation2 + $0x7c] sm:$0xf]
    %vm153 = vsmask.f32 7424
    %v155 = vshrl.u32 %v117, 16
    %v157 = vshll.u32 %v117, 16
    %v159 = vrot.slane %v157, 1
    %v160 = vor.u32 %v155, %v159
    %v162 = vshll.u32 %v118, 16
    %v164 = vrot.slane %v162, 1
    %v165 = vsel %vm153, %v160, %v164
    %v166 = vshrl.u32 %v118, 16
    %v168 = vor.u32 %v166, %v164
    %v170 = vshll.u32 %v119, 16
    %v172 = vrot.slane %v170, 1
    %v173 = vsel %vm153, %v168, %v172
    %v174 = vshrl.u32 %v119, 16
    %v176 = vor.u32 %v174, %v172
    %v178 = vshll.u32 %v120, 16
    %v180 = vrot.slane %v178, 1
    %v181 = vsel %vm153, %v176, %v180
    %v182 = vshrl.u32 %v120, 16
    %v184 = vor.u32 %v182, %v180
    %v186 = vshll.u32 0, 16
    %v188 = vrot.slane %v186, 1
    %v189 = vsel %vm153, %v184, %v188
    %v210 = vunpack.c.l.b16 %v137
    %v211 = vunpack.c.l.b16 %v138
    %v212 = vunpack.c.l.b16 %v139
    %v213 = vunpack.c.l.b16 %v140
    %v214 = vunpack.c.l.b16 %v141
    %v215 = vunpack.c.l.b16 %v142
    %v216 = vunpack.c.l.b16 %v143
    %v217 = vunpack.c.l.b16 %v144
    %v218 = vunpack.c.l.b16 %v145
    %v219 = vunpack.c.l.b16 %v146
    %v220 = vunpack.c.l.b16 %v147
    %v221 = vunpack.c.l.b16 %v148
    %v222 = vunpack.c.l.b16 %v149
    %v223 = vunpack.c.l.b16 %v150
    %v224 = vunpack.c.l.b16 %v151
    %v225 = vunpack.c.l.b16 %v152
    %v226 = vpack.c.b16 %v211, %v210
    %v227 = vpack.c.b16 %v213, %v212
    %v228 = vpack.c.b16 %v215, %v214
    %v229 = vpack.c.b16 %v217, %v216
    %v230 = vpack.c.b16 %v219, %v218
    %v231 = vpack.c.b16 %v221, %v220
    %v232 = vpack.c.b16 %v223, %v222
    %v233 = vpack.c.b16 %v225, %v224
    %242 = vmatprep.subr.bf16.mxu0 0
    %243 = vmatpush1.bf16.msra.mxu0 %v226
    %244 = vmatprep.subr.bf16.mxu0 0
    %245 = vmatpush1.bf16.msra.mxu0 %v227
    %246 = vmatprep.subr.bf16.mxu0 0
    %247 = vmatpush1.bf16.msra.mxu0 %v228
    %248 = vmatprep.subr.bf16.mxu0 0
    %249 = vmatpush1.bf16.msra.mxu0 %v229
    %250 = vmatprep.subr.bf16.mxu0 0
    %251 = vmatpush1.bf16.msra.mxu0 %v230
    %252 = vmatprep.subr.bf16.mxu0 0
    %253 = vmatpush1.bf16.msra.mxu0 %v231
    %254 = vmatprep.subr.bf16.mxu0 0
    %255 = vmatpush1.bf16.msra.mxu0 %v232
    %256 = vmatprep.subr.bf16.mxu0 0
    %257 = vmatpush1.bf16.msra.mxu0 %v233
    %258 = vmatprep.subr.bf16.mxu0 0
    %259 = vmatpush1.bf16.msra.mxu0 0
    %260 = vmatprep.subr.bf16.mxu0 0
    %261 = vmatpush1.bf16.msra.mxu0 0
    %262 = vmatprep.subr.bf16.mxu0 0
    %263 = vmatpush1.bf16.msra.mxu0 0
    %264 = vmatprep.subr.bf16.mxu0 0
    %265 = vmatpush1.bf16.msra.mxu0 0
    %266 = vmatprep.subr.bf16.mxu0 0
    %267 = vmatpush1.bf16.msra.mxu0 0
    %268 = vmatprep.subr.bf16.mxu0 0
    %269 = vmatpush1.bf16.msra.mxu0 0
    %270 = vmatprep.subr.bf16.mxu0 0
    %271 = vmatpush1.bf16.msra.mxu0 0
    %272 = vmatprep.subr.bf16.mxu0 0
    %273 = vmatpush1.bf16.msra.mxu0 0
    %274 = vmatprep.mubr.bf16.mxu0 0
    %275 = vmatmul.mubr.bf16.gmra.mrb[0].mxu0 %v165
    %v276 = vpop.f32.mrb[0].mxu0
    %v277 = vadd.f32 0.0, %v276
    %v278 = vpop.f32.mrb[0].mxu0
    %v279 = vpop.f32.mrb[0].mxu0
    %v280 = vadd.f32 0.0, %v279
    %v281 = vpop.f32.mrb[0].mxu0
    %282 = vmatprep.mubr.bf16.mxu0 0
    %283 = vmatmul.mubr.bf16.gmra.mrb[0].mxu0 %v173
    %v284 = vpop.f32.mrb[0].mxu0
    %v285 = vadd.f32 0.0, %v284
    %v286 = vpop.f32.mrb[0].mxu0
    %v287 = vpop.f32.mrb[0].mxu0
    %v288 = vadd.f32 0.0, %v287
    %v289 = vpop.f32.mrb[0].mxu0
    %290 = vmatprep.mubr.bf16.mxu0 0
    %291 = vmatmul.mubr.bf16.gmra.mrb[0].mxu0 %v181
    %v292 = vpop.f32.mrb[0].mxu0
    %v293 = vadd.f32 0.0, %v292
    %v294 = vpop.f32.mrb[0].mxu0
    %v295 = vpop.f32.mrb[0].mxu0
    %v296 = vadd.f32 0.0, %v295
    %v297 = vpop.f32.mrb[0].mxu0
    %298 = vmatprep.mubr.bf16.mxu0 0
    %299 = vmatmul.mubr.bf16.gmra.mrb[0].mxu0 %v189
    %v300 = vpop.f32.mrb[0].mxu0
    %v301 = vadd.f32 0.0, %v300
    %v302 = vpop.f32.mrb[0].mxu0
    %v303 = vpop.f32.mrb[0].mxu0
    %v304 = vadd.f32 0.0, %v303
    %v305 = vpop.f32.mrb[0].mxu0
    %306 = vdwg.mxu0
    %v327 = vunpack.c.l.b16 %v121
    %v328 = vunpack.c.l.b16 %v122
    %v329 = vunpack.c.l.b16 %v123
    %v330 = vunpack.c.l.b16 %v124
    %v331 = vunpack.c.l.b16 %v125
    %v332 = vunpack.c.l.b16 %v126
    %v333 = vunpack.c.l.b16 %v127
    %v334 = vunpack.c.l.b16 %v128
    %v335 = vunpack.c.l.b16 %v129
    %v336 = vunpack.c.l.b16 %v130
    %v337 = vunpack.c.l.b16 %v131
    %v338 = vunpack.c.l.b16 %v132
    %v339 = vunpack.c.l.b16 %v133
    %v340 = vunpack.c.l.b16 %v134
    %v341 = vunpack.c.l.b16 %v135
    %v342 = vunpack.c.l.b16 %v136
    %v343 = vpack.c.b16 %v328, %v327
    %v344 = vpack.c.b16 %v330, %v329
    %v345 = vpack.c.b16 %v332, %v331
    %v346 = vpack.c.b16 %v334, %v333
    %v347 = vpack.c.b16 %v336, %v335
    %v348 = vpack.c.b16 %v338, %v337
    %v349 = vpack.c.b16 %v340, %v339
    %v350 = vpack.c.b16 %v342, %v341
    %359 = vmatprep.subr.bf16.mxu0 0
    %360 = vmatpush1.bf16.msra.mxu0 %v343
    %361 = vmatprep.subr.bf16.mxu0 0
    %362 = vmatpush1.bf16.msra.mxu0 %v344
    %363 = vmatprep.subr.bf16.mxu0 0
    %364 = vmatpush1.bf16.msra.mxu0 %v345
    %365 = vmatprep.subr.bf16.mxu0 0
    %366 = vmatpush1.bf16.msra.mxu0 %v346
    %367 = vmatprep.subr.bf16.mxu0 0
    %368 = vmatpush1.bf16.msra.mxu0 %v347
    %369 = vmatprep.subr.bf16.mxu0 0
    %370 = vmatpush1.bf16.msra.mxu0 %v348
    %371 = vmatprep.subr.bf16.mxu0 0
    %372 = vmatpush1.bf16.msra.mxu0 %v349
    %373 = vmatprep.subr.bf16.mxu0 0
    %374 = vmatpush1.bf16.msra.mxu0 %v350
    %375 = vmatprep.subr.bf16.mxu0 0
    %376 = vmatpush1.bf16.msra.mxu0 0
    %377 = vmatprep.subr.bf16.mxu0 0
    %378 = vmatpush1.bf16.msra.mxu0 0
    %379 = vmatprep.subr.bf16.mxu0 0
    %380 = vmatpush1.bf16.msra.mxu0 0
    %381 = vmatprep.subr.bf16.mxu0 0
    %382 = vmatpush1.bf16.msra.mxu0 0
    %383 = vmatprep.subr.bf16.mxu0 0
    %384 = vmatpush1.bf16.msra.mxu0 0
    %385 = vmatprep.subr.bf16.mxu0 0
    %386 = vmatpush1.bf16.msra.mxu0 0
    %387 = vmatprep.subr.bf16.mxu0 0
    %388 = vmatpush1.bf16.msra.mxu0 0
    %389 = vmatprep.subr.bf16.mxu0 0
    %390 = vmatpush1.bf16.msra.mxu0 0
    %391 = vmatprep.mubr.bf16.mxu0 0
    %392 = vmatmul.mubr.bf16.gmra.mrb[0].mxu0 %v117
    %v393 = vpop.f32.mrb[0].mxu0
    %v394 = vadd.f32 %v277, %v393
    %v395 = vpop.f32.mrb[0].mxu0
    %v396 = vpop.f32.mrb[0].mxu0
    %v397 = vadd.f32 %v280, %v396
    %v398 = vpop.f32.mrb[0].mxu0
    %399 = vmatprep.mubr.bf16.mxu0 0
    %400 = vmatmul.mubr.bf16.gmra.mrb[0].mxu0 %v118
    %v401 = vpop.f32.mrb[0].mxu0
    %v402 = vadd.f32 %v285, %v401
    %v403 = vpop.f32.mrb[0].mxu0
    %v404 = vpop.f32.mrb[0].mxu0
    %v405 = vadd.f32 %v288, %v404
    %v406 = vpop.f32.mrb[0].mxu0
    %407 = vmatprep.mubr.bf16.mxu0 0
    %408 = vmatmul.mubr.bf16.gmra.mrb[0].mxu0 %v119
    %v409 = vpop.f32.mrb[0].mxu0
    %v410 = vadd.f32 %v293, %v409
    %v411 = vpop.f32.mrb[0].mxu0
    %v412 = vpop.f32.mrb[0].mxu0
    %v413 = vadd.f32 %v296, %v412
    %v414 = vpop.f32.mrb[0].mxu0
    %415 = vmatprep.mubr.bf16.mxu0 0
    %416 = vmatmul.mubr.bf16.gmra.mrb[0].mxu0 %v120
    %v417 = vpop.f32.mrb[0].mxu0
    %v418 = vadd.f32 %v301, %v417
    %v419 = vpop.f32.mrb[0].mxu0
    %v420 = vpop.f32.mrb[0].mxu0
    %v421 = vadd.f32 %v304, %v420
    %v422 = vpop.f32.mrb[0].mxu0
    %423 = vdwg.mxu0
    %v424 = vld [vmem:[#allocation2 + $0x80] sm:$0xf]
    %v425 = vld [vmem:[#allocation2 + $0x84] sm:$0xf]
    %v426 = vld [vmem:[#allocation2 + $0x88] sm:$0xf]
    %v427 = vld [vmem:[#allocation2 + $0x8c] sm:$0xf]
    %v428 = vld [vmem:[#allocation2 + $0x90] sm:$0xf]
    %v429 = vld [vmem:[#allocation2 + $0x94] sm:$0xf]
    %v430 = vld [vmem:[#allocation2 + $0x98] sm:$0xf]
    %v431 = vld [vmem:[#allocation2 + $0x9c] sm:$0xf]
    %v432 = vld [vmem:[#allocation2 + $0xa0] sm:$0xf]
    %v433 = vld [vmem:[#allocation2 + $0xa4] sm:$0xf]
    %v434 = vld [vmem:[#allocation2 + $0xa8] sm:$0xf]
    %v435 = vld [vmem:[#allocation2 + $0xac] sm:$0xf]
    %v436 = vld [vmem:[#allocation2 + $0xb0] sm:$0xf]
    %v437 = vld [vmem:[#allocation2 + $0xb4] sm:$0xf]
    %v438 = vld [vmem:[#allocation2 + $0xb8] sm:$0xf]
    %v439 = vld [vmem:[#allocation2 + $0xbc] sm:$0xf]
    %vm441 = vcmask 1046528
    %v442 = vrot.slane %v117, 1
    %v443 = vrot.slane %v118, 1
    %v444 = vsel %vm441, %v442, %v443
    %v445 = vrot.slane %v119, 1
    %v446 = vsel %vm441, %v443, %v445
    %v447 = vrot.slane %v120, 1
    %v448 = vsel %vm441, %v445, %v447
    %v449 = vrot.slane 0, 1
    %v450 = vsel %vm441, %v447, %v449
    %v471 = vunpack.c.l.b16 %v424
    %v472 = vunpack.c.l.b16 %v425
    %v473 = vunpack.c.l.b16 %v426
    %v474 = vunpack.c.l.b16 %v427
    %v475 = vunpack.c.l.b16 %v428
    %v476 = vunpack.c.l.b16 %v429
    %v477 = vunpack.c.l.b16 %v430
    %v478 = vunpack.c.l.b16 %v431
    %v479 = vunpack.c.l.b16 %v432
    %v480 = vunpack.c.l.b16 %v433
    %v481 = vunpack.c.l.b16 %v434
    %v482 = vunpack.c.l.b16 %v435
    %v483 = vunpack.c.l.b16 %v436
    %v484 = vunpack.c.l.b16 %v437
    %v485 = vunpack.c.l.b16 %v438
    %v486 = vunpack.c.l.b16 %v439
    %v487 = vpack.c.b16 %v472, %v471
    %v488 = vpack.c.b16 %v474, %v473
    %v489 = vpack.c.b16 %v476, %v475
    %v490 = vpack.c.b16 %v478, %v477
    %v491 = vpack.c.b16 %v480, %v479
    %v492 = vpack.c.b16 %v482, %v481
    %v493 = vpack.c.b16 %v484, %v483
    %v494 = vpack.c.b16 %v486, %v485
    %503 = vmatprep.subr.bf16.mxu0 0
    %504 = vmatpush1.bf16.msra.mxu0 %v487
    %505 = vmatprep.subr.bf16.mxu0 0
    %506 = vmatpush1.bf16.msra.mxu0 %v488
    %507 = vmatprep.subr.bf16.mxu0 0
    %508 = vmatpush1.bf16.msra.mxu0 %v489
    %509 = vmatprep.subr.bf16.mxu0 0
    %510 = vmatpush1.bf16.msra.mxu0 %v490
    %511 = vmatprep.subr.bf16.mxu0 0
    %512 = vmatpush1.bf16.msra.mxu0 %v491
    %513 = vmatprep.subr.bf16.mxu0 0
    %514 = vmatpush1.bf16.msra.mxu0 %v492
    %515 = vmatprep.subr.bf16.mxu0 0
    %516 = vmatpush1.bf16.msra.mxu0 %v493
    %517 = vmatprep.subr.bf16.mxu0 0
    %518 = vmatpush1.bf16.msra.mxu0 %v494
    %519 = vmatprep.subr.bf16.mxu0 0
    %520 = vmatpush1.bf16.msra.mxu0 0
    %521 = vmatprep.subr.bf16.mxu0 0
    %522 = vmatpush1.bf16.msra.mxu0 0
    %523 = vmatprep.subr.bf16.mxu0 0
    %524 = vmatpush1.bf16.msra.mxu0 0
    %525 = vmatprep.subr.bf16.mxu0 0
    %526 = vmatpush1.bf16.msra.mxu0 0
    %527 = vmatprep.subr.bf16.mxu0 0
    %528 = vmatpush1.bf16.msra.mxu0 0
    %529 = vmatprep.subr.bf16.mxu0 0
    %530 = vmatpush1.bf16.msra.mxu0 0
    %531 = vmatprep.subr.bf16.mxu0 0
    %532 = vmatpush1.bf16.msra.mxu0 0
    %533 = vmatprep.subr.bf16.mxu0 0
    %534 = vmatpush1.bf16.msra.mxu0 0
    %535 = vmatprep.mubr.bf16.mxu0 0
    %536 = vmatmul.mubr.bf16.gmra.mrb[0].mxu0 %v444
    %v537 = vpop.f32.mrb[0].mxu0
    %v538 = vadd.f32 0.0, %v537
    %v539 = vpop.f32.mrb[0].mxu0
    %v540 = vpop.f32.mrb[0].mxu0
    %v541 = vadd.f32 0.0, %v540
    %v542 = vpop.f32.mrb[0].mxu0
    %543 = vmatprep.mubr.bf16.mxu0 0
    %544 = vmatmul.mubr.bf16.gmra.mrb[0].mxu0 %v446
    %v545 = vpop.f32.mrb[0].mxu0
    %v546 = vadd.f32 0.0, %v545
    %v547 = vpop.f32.mrb[0].mxu0
    %v548 = vpop.f32.mrb[0].mxu0
    %v549 = vadd.f32 0.0, %v548
    %v550 = vpop.f32.mrb[0].mxu0
    %551 = vmatprep.mubr.bf16.mxu0 0
    %552 = vmatmul.mubr.bf16.gmra.mrb[0].mxu0 %v448
    %v553 = vpop.f32.mrb[0].mxu0
    %v554 = vadd.f32 0.0, %v553
    %v555 = vpop.f32.mrb[0].mxu0
    %v556 = vpop.f32.mrb[0].mxu0
    %v557 = vadd.f32 0.0, %v556
    %v558 = vpop.f32.mrb[0].mxu0
    %559 = vmatprep.mubr.bf16.mxu0 0
    %560 = vmatmul.mubr.bf16.gmra.mrb[0].mxu0 %v450
    %v561 = vpop.f32.mrb[0].mxu0
    %v562 = vadd.f32 0.0, %v561
    %v563 = vpop.f32.mrb[0].mxu0
    %v564 = vpop.f32.mrb[0].mxu0
    %v565 = vadd.f32 0.0, %v564
    %v566 = vpop.f32.mrb[0].mxu0
    %567 = vdwg.mxu0
    %v568 = vadd.f32 %v394, %v538
    %v569 = vadd.f32 %v397, %v541
    %v570 = vadd.f32 %v402, %v546
    %v571 = vadd.f32 %v405, %v549
    %v572 = vadd.f32 %v410, %v554
    %v573 = vadd.f32 %v413, %v557
    %v574 = vadd.f32 %v418, %v562
    %v575 = vadd.f32 %v421, %v565
    %v576 = vld [vmem:[#allocation2 + $0xc0] sm:$0xf]
    %v577 = vld [vmem:[#allocation2 + $0xc4] sm:$0xf]
    %v578 = vld [vmem:[#allocation2 + $0xc8] sm:$0xf]
    %v579 = vld [vmem:[#allocation2 + $0xcc] sm:$0xf]
    %v580 = vld [vmem:[#allocation2 + $0xd0] sm:$0xf]
    %v581 = vld [vmem:[#allocation2 + $0xd4] sm:$0xf]
    %v582 = vld [vmem:[#allocation2 + $0xd8] sm:$0xf]
    %v583 = vld [vmem:[#allocation2 + $0xdc] sm:$0xf]
    %v584 = vld [vmem:[#allocation2 + $0xe0] sm:$0xf]
    %v585 = vld [vmem:[#allocation2 + $0xe4] sm:$0xf]
    %v586 = vld [vmem:[#allocation2 + $0xe8] sm:$0xf]
    %v587 = vld [vmem:[#allocation2 + $0xec] sm:$0xf]
    %v588 = vld [vmem:[#allocation2 + $0xf0] sm:$0xf]
    %v589 = vld [vmem:[#allocation2 + $0xf4] sm:$0xf]
    %v590 = vld [vmem:[#allocation2 + $0xf8] sm:$0xf]
    %v591 = vld [vmem:[#allocation2 + $0xfc] sm:$0xf]
    %vm592 = vsmask.f32 6400
    %v593 = vrot.slane %v155, 1
    %v594 = vrot.slane %v157, 2
    %v595 = vor.u32 %v593, %v594
    %v596 = vrot.slane %v166, 1
    %v597 = vrot.slane %v162, 2
    %v598 = vor.u32 %v596, %v597
    %v599 = vsel %vm592, %v595, %v598
    %v600 = vrot.slane %v174, 1
    %v601 = vrot.slane %v170, 2
    %v602 = vor.u32 %v600, %v601
    %v603 = vsel %vm592, %v598, %v602
    %v604 = vrot.slane %v182, 1
    %v605 = vrot.slane %v178, 2
    %v606 = vor.u32 %v604, %v605
    %v607 = vsel %vm592, %v602, %v606
    %v608 = vshrl.u32 0, 16
    %v610 = vrot.slane %v608, 1
    %v611 = vrot.slane %v186, 2
    %v612 = vor.u32 %v610, %v611
    %v613 = vsel %vm592, %v606, %v612
    %v634 = vunpack.c.l.b16 %v576
    %v635 = vunpack.c.l.b16 %v577
    %v636 = vunpack.c.l.b16 %v578
    %v637 = vunpack.c.l.b16 %v579
    %v638 = vunpack.c.l.b16 %v580
    %v639 = vunpack.c.l.b16 %v581
    %v640 = vunpack.c.l.b16 %v582
    %v641 = vunpack.c.l.b16 %v583
    %v642 = vunpack.c.l.b16 %v584
    %v643 = vunpack.c.l.b16 %v585
    %v644 = vunpack.c.l.b16 %v586
    %v645 = vunpack.c.l.b16 %v587
    %v646 = vunpack.c.l.b16 %v588
    %v647 = vunpack.c.l.b16 %v589
    %v648 = vunpack.c.l.b16 %v590
    %v649 = vunpack.c.l.b16 %v591
    %v650 = vpack.c.b16 %v635, %v634
    %v651 = vpack.c.b16 %v637, %v636
    %v652 = vpack.c.b16 %v639, %v638
    %v653 = vpack.c.b16 %v641, %v640
    %v654 = vpack.c.b16 %v643, %v642
    %v655 = vpack.c.b16 %v645, %v644
    %v656 = vpack.c.b16 %v647, %v646
    %v657 = vpack.c.b16 %v649, %v648
    %666 = vmatprep.subr.bf16.mxu0 0
    %667 = vmatpush1.bf16.msra.mxu0 %v650
    %668 = vmatprep.subr.bf16.mxu0 0
    %669 = vmatpush1.bf16.msra.mxu0 %v651
    %670 = vmatprep.subr.bf16.mxu0 0
    %671 = vmatpush1.bf16.msra.mxu0 %v652
    %672 = vmatprep.subr.bf16.mxu0 0
    %673 = vmatpush1.bf16.msra.mxu0 %v653
    %674 = vmatprep.subr.bf16.mxu0 0
    %675 = vmatpush1.bf16.msra.mxu0 %v654
    %676 = vmatprep.subr.bf16.mxu0 0
    %677 = vmatpush1.bf16.msra.mxu0 %v655
    %678 = vmatprep.subr.bf16.mxu0 0
    %679 = vmatpush1.bf16.msra.mxu0 %v656
    %680 = vmatprep.subr.bf16.mxu0 0
    %681 = vmatpush1.bf16.msra.mxu0 %v657
    %682 = vmatprep.subr.bf16.mxu0 0
    %683 = vmatpush1.bf16.msra.mxu0 0
    %684 = vmatprep.subr.bf16.mxu0 0
    %685 = vmatpush1.bf16.msra.mxu0 0
    %686 = vmatprep.subr.bf16.mxu0 0
    %687 = vmatpush1.bf16.msra.mxu0 0
    %688 = vmatprep.subr.bf16.mxu0 0
    %689 = vmatpush1.bf16.msra.mxu0 0
    %690 = vmatprep.subr.bf16.mxu0 0
    %691 = vmatpush1.bf16.msra.mxu0 0
    %692 = vmatprep.subr.bf16.mxu0 0
    %693 = vmatpush1.bf16.msra.mxu0 0
    %694 = vmatprep.subr.bf16.mxu0 0
    %695 = vmatpush1.bf16.msra.mxu0 0
    %696 = vmatprep.subr.bf16.mxu0 0
    %697 = vmatpush1.bf16.msra.mxu0 0
    %698 = vmatprep.mubr.bf16.mxu0 0
    %699 = vmatmul.mubr.bf16.gmra.mrb[0].mxu0 %v599
    %v700 = vpop.f32.mrb[0].mxu0
    %v701 = vadd.f32 0.0, %v700
    %v702 = vpop.f32.mrb[0].mxu0
    %v703 = vpop.f32.mrb[0].mxu0
    %v704 = vadd.f32 0.0, %v703
    %v705 = vpop.f32.mrb[0].mxu0
    %706 = vmatprep.mubr.bf16.mxu0 0
    %707 = vmatmul.mubr.bf16.gmra.mrb[0].mxu0 %v603
    %v708 = vpop.f32.mrb[0].mxu0
    %v709 = vadd.f32 0.0, %v708
    %v710 = vpop.f32.mrb[0].mxu0
    %v711 = vpop.f32.mrb[0].mxu0
    %v712 = vadd.f32 0.0, %v711
    %v713 = vpop.f32.mrb[0].mxu0
    %714 = vmatprep.mubr.bf16.mxu0 0
    %715 = vmatmul.mubr.bf16.gmra.mrb[0].mxu0 %v607
    %v716 = vpop.f32.mrb[0].mxu0
    %v717 = vadd.f32 0.0, %v716
    %v718 = vpop.f32.mrb[0].mxu0
    %v719 = vpop.f32.mrb[0].mxu0
    %v720 = vadd.f32 0.0, %v719
    %v721 = vpop.f32.mrb[0].mxu0
    %722 = vmatprep.mubr.bf16.mxu0 0
    %723 = vmatmul.mubr.bf16.gmra.mrb[0].mxu0 %v613
    %v724 = vpop.f32.mrb[0].mxu0
    %v725 = vadd.f32 0.0, %v724
    %v726 = vpop.f32.mrb[0].mxu0
    %v727 = vpop.f32.mrb[0].mxu0
    %v728 = vadd.f32 0.0, %v727
    %v729 = vpop.f32.mrb[0].mxu0
    %730 = vdwg.mxu0
    %v731 = vadd.f32 %v568, %v701
    %v732 = vadd.f32 %v569, %v704
    %v733 = vadd.f32 %v570, %v709
    %v734 = vadd.f32 %v571, %v712
    %v735 = vadd.f32 %v572, %v717
    %v736 = vadd.f32 %v573, %v720
    %v737 = vadd.f32 %v574, %v725
    %v738 = vadd.f32 %v575, %v728
    %v739 = vld [vmem:[#allocation2 + $0x100] sm:$0xf]
    %v740 = vld [vmem:[#allocation2 + $0x104] sm:$0xf]
    %v741 = vld [vmem:[#allocation2 + $0x108] sm:$0xf]
    %v742 = vld [vmem:[#allocation2 + $0x10c] sm:$0xf]
    %v743 = vld [vmem:[#allocation2 + $0x110] sm:$0xf]
    %v744 = vld [vmem:[#allocation2 + $0x114] sm:$0xf]
    %v745 = vld [vmem:[#allocation2 + $0x118] sm:$0xf]
    %v746 = vld [vmem:[#allocation2 + $0x11c] sm:$0xf]
    %v747 = vld [vmem:[#allocation2 + $0x120] sm:$0xf]
    %v748 = vld [vmem:[#allocation2 + $0x124] sm:$0xf]
    %v749 = vld [vmem:[#allocation2 + $0x128] sm:$0xf]
    %v750 = vld [vmem:[#allocation2 + $0x12c] sm:$0xf]
    %v751 = vld [vmem:[#allocation2 + $0x130] sm:$0xf]
    %v752 = vld [vmem:[#allocation2 + $0x134] sm:$0xf]
    %v753 = vld [vmem:[#allocation2 + $0x138] sm:$0xf]
    %v754 = vld [vmem:[#allocation2 + $0x13c] sm:$0xf]
    %vm755 = vcmask 1045504
    %v756 = vrot.slane %v117, 2
    %v757 = vrot.slane %v118, 2
    %v758 = vsel %vm755, %v756, %v757
    %v759 = vrot.slane %v119, 2
    %v760 = vsel %vm755, %v757, %v759
    %v761 = vrot.slane %v120, 2
    %v762 = vsel %vm755, %v759, %v761
    %v763 = vrot.slane 0, 2
    %v764 = vsel %vm755, %v761, %v763
    %v785 = vunpack.c.l.b16 %v739
    %v786 = vunpack.c.l.b16 %v740
    %v787 = vunpack.c.l.b16 %v741
    %v788 = vunpack.c.l.b16 %v742
    %v789 = vunpack.c.l.b16 %v743
    %v790 = vunpack.c.l.b16 %v744
    %v791 = vunpack.c.l.b16 %v745
    %v792 = vunpack.c.l.b16 %v746
    %v793 = vunpack.c.l.b16 %v747
    %v794 = vunpack.c.l.b16 %v748
    %v795 = vunpack.c.l.b16 %v749
    %v796 = vunpack.c.l.b16 %v750
    %v797 = vunpack.c.l.b16 %v751
    %v798 = vunpack.c.l.b16 %v752
    %v799 = vunpack.c.l.b16 %v753
    %v800 = vunpack.c.l.b16 %v754
    %v801 = vpack.c.b16 %v786, %v785
    %v802 = vpack.c.b16 %v788, %v787
    %v803 = vpack.c.b16 %v790, %v789
    %v804 = vpack.c.b16 %v792, %v791
    %v805 = vpack.c.b16 %v794, %v793
    %v806 = vpack.c.b16 %v796, %v795
    %v807 = vpack.c.b16 %v798, %v797
    %v808 = vpack.c.b16 %v800, %v799
    %817 = vmatprep.subr.bf16.mxu0 0
    %818 = vmatpush1.bf16.msra.mxu0 %v801
    %819 = vmatprep.subr.bf16.mxu0 0
    %820 = vmatpush1.bf16.msra.mxu0 %v802
    %821 = vmatprep.subr.bf16.mxu0 0
    %822 = vmatpush1.bf16.msra.mxu0 %v803
    %823 = vmatprep.subr.bf16.mxu0 0
    %824 = vmatpush1.bf16.msra.mxu0 %v804
    %825 = vmatprep.subr.bf16.mxu0 0
    %826 = vmatpush1.bf16.msra.mxu0 %v805
    %827 = vmatprep.subr.bf16.mxu0 0
    %828 = vmatpush1.bf16.msra.mxu0 %v806
    %829 = vmatprep.subr.bf16.mxu0 0
    %830 = vmatpush1.bf16.msra.mxu0 %v807
    %831 = vmatprep.subr.bf16.mxu0 0
    %832 = vmatpush1.bf16.msra.mxu0 %v808
    %833 = vmatprep.subr.bf16.mxu0 0
    %834 = vmatpush1.bf16.msra.mxu0 0
    %835 = vmatprep.subr.bf16.mxu0 0
    %836 = vmatpush1.bf16.msra.mxu0 0
    %837 = vmatprep.subr.bf16.mxu0 0
    %838 = vmatpush1.bf16.msra.mxu0 0
    %839 = vmatprep.subr.bf16.mxu0 0
    %840 = vmatpush1.bf16.msra.mxu0 0
    %841 = vmatprep.subr.bf16.mxu0 0
    %842 = vmatpush1.bf16.msra.mxu0 0
    %843 = vmatprep.subr.bf16.mxu0 0
    %844 = vmatpush1.bf16.msra.mxu0 0
    %845 = vmatprep.subr.bf16.mxu0 0
    %846 = vmatpush1.bf16.msra.mxu0 0
    %847 = vmatprep.subr.bf16.mxu0 0
    %848 = vmatpush1.bf16.msra.mxu0 0
    %849 = vmatprep.mubr.bf16.mxu0 0
    %850 = vmatmul.mubr.bf16.gmra.mrb[0].mxu0 %v758
    %v851 = vpop.f32.mrb[0].mxu0
    %v852 = vadd.f32 0.0, %v851
    %v853 = vpop.f32.mrb[0].mxu0
    %v854 = vpop.f32.mrb[0].mxu0
    %v855 = vadd.f32 0.0, %v854
    %v856 = vpop.f32.mrb[0].mxu0
    %857 = vmatprep.mubr.bf16.mxu0 0
    %858 = vmatmul.mubr.bf16.gmra.mrb[0].mxu0 %v760
    %v859 = vpop.f32.mrb[0].mxu0
    %v860 = vadd.f32 0.0, %v859
    %v861 = vpop.f32.mrb[0].mxu0
    %v862 = vpop.f32.mrb[0].mxu0
    %v863 = vadd.f32 0.0, %v862
    %v864 = vpop.f32.mrb[0].mxu0
    %865 = vmatprep.mubr.bf16.mxu0 0
    %866 = vmatmul.mubr.bf16.gmra.mrb[0].mxu0 %v762
    %v867 = vpop.f32.mrb[0].mxu0
    %v868 = vadd.f32 0.0, %v867
    %v869 = vpop.f32.mrb[0].mxu0
    %v870 = vpop.f32.mrb[0].mxu0
    %v871 = vadd.f32 0.0, %v870
    %v872 = vpop.f32.mrb[0].mxu0
    %873 = vmatprep.mubr.bf16.mxu0 0
    %874 = vmatmul.mubr.bf16.gmra.mrb[0].mxu0 %v764
    %v875 = vpop.f32.mrb[0].mxu0
    %v876 = vadd.f32 0.0, %v875
    %v877 = vpop.f32.mrb[0].mxu0
    %v878 = vpop.f32.mrb[0].mxu0
    %v879 = vadd.f32 0.0, %v878
    %v880 = vpop.f32.mrb[0].mxu0
    %881 = vdwg.mxu0
    %v882 = vadd.f32 %v731, %v852
    %v883 = vadd.f32 %v732, %v855
    %v884 = vadd.f32 %v733, %v860
    %v885 = vadd.f32 %v734, %v863
    %v886 = vadd.f32 %v735, %v868
    %v887 = vadd.f32 %v736, %v871
    %v888 = vadd.f32 %v737, %v876
    %v889 = vadd.f32 %v738, %v879
    %v890 = vlaneseq
    %v891 = vshrl.u32 %v890, 7
    %v892 = vsub.s32 0, %v891
    %v893 = vrot.slane %v86, %v892
    %v894 = vadd.f32 %v882, %v893
    %v895 = vadd.f32 %v883, %v893
    %v896 = vadd.f32 %v884, %v893
    %v897 = vadd.f32 %v885, %v893
    %v898 = vadd.f32 %v886, %v893
    %v899 = vadd.f32 %v887, %v893
    %v900 = vadd.f32 %v888, %v893
    %v901 = vadd.f32 %v889, %v893
    %v902 = vmax.f32 %v894, 0.0
    %v903 = vmax.f32 %v895, 0.0
    %v904 = vmax.f32 %v896, 0.0
    %v905 = vmax.f32 %v897, 0.0
    %v906 = vmax.f32 %v898, 0.0
    %v907 = vmax.f32 %v899, 0.0
    %v908 = vmax.f32 %v900, 0.0
    %v909 = vmax.f32 %v901, 0.0
    %v910 = vpack.c.bf16 %v903, %v902
    %v911 = vpack.c.bf16 %v905, %v904
    %v912 = vpack.c.bf16 %v907, %v906
    %v913 = vpack.c.bf16 %v909, %v908
    %v914 = vld [vmem:[#allocation5] sm:$0xf]
    %v915 = vld [vmem:[#allocation5 + $0x4] sm:$0xf]
    %v916 = vld [vmem:[#allocation5 + $0x8] sm:$0xf]
    %v917 = vld [vmem:[#allocation5 + $0xc] sm:$0xf]
    %v918 = vld [vmem:[#allocation5 + $0x10] sm:$0xf]
    %v919 = vld [vmem:[#allocation5 + $0x14] sm:$0xf]
    %v920 = vld [vmem:[#allocation5 + $0x18] sm:$0xf]
    %v921 = vld [vmem:[#allocation5 + $0x1c] sm:$0xf]
    %v922 = vld [vmem:[#allocation5 + $0x20] sm:$0xf]
    %v923 = vld [vmem:[#allocation5 + $0x24] sm:$0xf]
    %v924 = vld [vmem:[#allocation5 + $0x28] sm:$0xf]
    %v925 = vld [vmem:[#allocation5 + $0x2c] sm:$0xf]
    %v926 = vld [vmem:[#allocation5 + $0x30] sm:$0xf]
    %v927 = vld [vmem:[#allocation5 + $0x34] sm:$0xf]
    %v928 = vld [vmem:[#allocation5 + $0x38] sm:$0xf]
    %v929 = vld [vmem:[#allocation5 + $0x3c] sm:$0xf]
    %v930 = vld [vmem:[#allocation5 + $0x40] sm:$0xf]
    %v931 = vld [vmem:[#allocation5 + $0x44] sm:$0xf]
    %v932 = vld [vmem:[#allocation5 + $0x48] sm:$0xf]
    %v933 = vld [vmem:[#allocation5 + $0x4c] sm:$0xf]
    %v934 = vld [vmem:[#allocation5 + $0x50] sm:$0xf]
    %v935 = vld [vmem:[#allocation5 + $0x54] sm:$0xf]
    %v936 = vld [vmem:[#allocation5 + $0x58] sm:$0xf]
    %v937 = vld [vmem:[#allocation5 + $0x5c] sm:$0xf]
    %v938 = vld [vmem:[#allocation5 + $0x60] sm:$0xf]
    %v939 = vld [vmem:[#allocation5 + $0x64] sm:$0xf]
    %v940 = vld [vmem:[#allocation5 + $0x68] sm:$0xf]
    %v941 = vld [vmem:[#allocation5 + $0x6c] sm:$0xf]
    %v942 = vld [vmem:[#allocation5 + $0x70] sm:$0xf]
    %v943 = vld [vmem:[#allocation5 + $0x74] sm:$0xf]
    %v944 = vld [vmem:[#allocation5 + $0x78] sm:$0xf]
    %v945 = vld [vmem:[#allocation5 + $0x7c] sm:$0xf]
    %v950 = vrot.slane %v910, 1
    %v951 = vrot.slane %v911, 1
    %v952 = vsel %vm441, %v950, %v951
    %v953 = vrot.slane %v912, 1
    %v954 = vsel %vm441, %v951, %v953
    %v955 = vrot.slane %v913, 1
    %v956 = vsel %vm441, %v953, %v955
    %v957 = vsel %vm441, %v955, %v449
    %v978 = vunpack.c.l.b16 %v930
    %v979 = vunpack.c.l.b16 %v931
    %v980 = vunpack.c.l.b16 %v932
    %v981 = vunpack.c.l.b16 %v933
    %v982 = vunpack.c.l.b16 %v934
    %v983 = vunpack.c.l.b16 %v935
    %v984 = vunpack.c.l.b16 %v936
    %v985 = vunpack.c.l.b16 %v937
    %v986 = vunpack.c.l.b16 %v938
    %v987 = vunpack.c.l.b16 %v939
    %v988 = vunpack.c.l.b16 %v940
    %v989 = vunpack.c.l.b16 %v941
    %v990 = vunpack.c.l.b16 %v942
    %v991 = vunpack.c.l.b16 %v943
    %v992 = vunpack.c.l.b16 %v944
    %v993 = vunpack.c.l.b16 %v945
    %v994 = vpack.c.b16 %v979, %v978
    %v995 = vpack.c.b16 %v981, %v980
    %v996 = vpack.c.b16 %v983, %v982
    %v997 = vpack.c.b16 %v985, %v984
    %v998 = vpack.c.b16 %v987, %v986
    %v999 = vpack.c.b16 %v989, %v988
    %v1000 = vpack.c.b16 %v991, %v990
    %v1001 = vpack.c.b16 %v993, %v992
    %1010 = vmatprep.subr.bf16.mxu0 0
    %1011 = vmatpush1.bf16.msra.mxu0 %v994
    %1012 = vmatprep.subr.bf16.mxu0 0
    %1013 = vmatpush1.bf16.msra.mxu0 %v995
    %1014 = vmatprep.subr.bf16.mxu0 0
    %1015 = vmatpush1.bf16.msra.mxu0 %v996
    %1016 = vmatprep.subr.bf16.mxu0 0
    %1017 = vmatpush1.bf16.msra.mxu0 %v997
    %1018 = vmatprep.subr.bf16.mxu0 0
    %1019 = vmatpush1.bf16.msra.mxu0 %v998
    %1020 = vmatprep.subr.bf16.mxu0 0
    %1021 = vmatpush1.bf16.msra.mxu0 %v999
    %1022 = vmatprep.subr.bf16.mxu0 0
    %1023 = vmatpush1.bf16.msra.mxu0 %v1000
    %1024 = vmatprep.subr.bf16.mxu0 0
    %1025 = vmatpush1.bf16.msra.mxu0 %v1001
    %1026 = vmatprep.subr.bf16.mxu0 0
    %1027 = vmatpush1.bf16.msra.mxu0 0
    %1028 = vmatprep.subr.bf16.mxu0 0
    %1029 = vmatpush1.bf16.msra.mxu0 0
    %1030 = vmatprep.subr.bf16.mxu0 0
    %1031 = vmatpush1.bf16.msra.mxu0 0
    %1032 = vmatprep.subr.bf16.mxu0 0
    %1033 = vmatpush1.bf16.msra.mxu0 0
    %1034 = vmatprep.subr.bf16.mxu0 0
    %1035 = vmatpush1.bf16.msra.mxu0 0
    %1036 = vmatprep.subr.bf16.mxu0 0
    %1037 = vmatpush1.bf16.msra.mxu0 0
    %1038 = vmatprep.subr.bf16.mxu0 0
    %1039 = vmatpush1.bf16.msra.mxu0 0
    %1040 = vmatprep.subr.bf16.mxu0 0
    %1041 = vmatpush1.bf16.msra.mxu0 0
    %1042 = vmatprep.mubr.bf16.mxu0 0
    %1043 = vmatmul.mubr.bf16.gmra.mrb[0].mxu0 %v952
    %v1044 = vpop.f32.mrb[0].mxu0
    %v1045 = vadd.f32 0.0, %v1044
    %v1046 = vpop.f32.mrb[0].mxu0
    %v1047 = vpop.f32.mrb[0].mxu0
    %v1048 = vadd.f32 0.0, %v1047
    %v1049 = vpop.f32.mrb[0].mxu0
    %1050 = vmatprep.mubr.bf16.mxu0 0
    %1051 = vmatmul.mubr.bf16.gmra.mrb[0].mxu0 %v954
    %v1052 = vpop.f32.mrb[0].mxu0
    %v1053 = vadd.f32 0.0, %v1052
    %v1054 = vpop.f32.mrb[0].mxu0
    %v1055 = vpop.f32.mrb[0].mxu0
    %v1056 = vadd.f32 0.0, %v1055
    %v1057 = vpop.f32.mrb[0].mxu0
    %1058 = vmatprep.mubr.bf16.mxu0 0
    %1059 = vmatmul.mubr.bf16.gmra.mrb[0].mxu0 %v956
    %v1060 = vpop.f32.mrb[0].mxu0
    %v1061 = vadd.f32 0.0, %v1060
    %v1062 = vpop.f32.mrb[0].mxu0
    %v1063 = vpop.f32.mrb[0].mxu0
    %v1064 = vadd.f32 0.0, %v1063
    %v1065 = vpop.f32.mrb[0].mxu0
    %1066 = vmatprep.mubr.bf16.mxu0 0
    %1067 = vmatmul.mubr.bf16.gmra.mrb[0].mxu0 %v957
    %v1068 = vpop.f32.mrb[0].mxu0
    %v1069 = vadd.f32 0.0, %v1068
    %v1070 = vpop.f32.mrb[0].mxu0
    %v1071 = vpop.f32.mrb[0].mxu0
    %v1072 = vadd.f32 0.0, %v1071
    %v1073 = vpop.f32.mrb[0].mxu0
    %1074 = vdwg.mxu0
    %v1091 = vunpack.c.l.b16 %v914
    %v1092 = vunpack.c.l.b16 %v915
    %v1093 = vunpack.c.l.b16 %v916
    %v1094 = vunpack.c.l.b16 %v917
    %v1095 = vunpack.c.l.b16 %v918
    %v1096 = vunpack.c.l.b16 %v919
    %v1097 = vunpack.c.l.b16 %v920
    %v1098 = vunpack.c.l.b16 %v921
    %v1099 = vunpack.c.l.b16 %v922
    %v1100 = vunpack.c.l.b16 %v923
    %v1101 = vunpack.c.l.b16 %v924
    %v1102 = vunpack.c.l.b16 %v925
    %v1103 = vunpack.c.l.b16 %v926
    %v1104 = vunpack.c.l.b16 %v927
    %v1105 = vunpack.c.l.b16 %v928
    %v1106 = vunpack.c.l.b16 %v929
    %v1107 = vpack.c.b16 %v1092, %v1091
    %v1108 = vpack.c.b16 %v1094, %v1093
    %v1109 = vpack.c.b16 %v1096, %v1095
    %v1110 = vpack.c.b16 %v1098, %v1097
    %v1111 = vpack.c.b16 %v1100, %v1099
    %v1112 = vpack.c.b16 %v1102, %v1101
    %v1113 = vpack.c.b16 %v1104, %v1103
    %v1114 = vpack.c.b16 %v1106, %v1105
    %1123 = vmatprep.subr.bf16.mxu0 0
    %1124 = vmatpush1.bf16.msra.mxu0 %v1107
    %1125 = vmatprep.subr.bf16.mxu0 0
    %1126 = vmatpush1.bf16.msra.mxu0 %v1108
    %1127 = vmatprep.subr.bf16.mxu0 0
    %1128 = vmatpush1.bf16.msra.mxu0 %v1109
    %1129 = vmatprep.subr.bf16.mxu0 0
    %1130 = vmatpush1.bf16.msra.mxu0 %v1110
    %1131 = vmatprep.subr.bf16.mxu0 0
    %1132 = vmatpush1.bf16.msra.mxu0 %v1111
    %1133 = vmatprep.subr.bf16.mxu0 0
    %1134 = vmatpush1.bf16.msra.mxu0 %v1112
    %1135 = vmatprep.subr.bf16.mxu0 0
    %1136 = vmatpush1.bf16.msra.mxu0 %v1113
    %1137 = vmatprep.subr.bf16.mxu0 0
    %1138 = vmatpush1.bf16.msra.mxu0 %v1114
    %1139 = vmatprep.subr.bf16.mxu0 0
    %1140 = vmatpush1.bf16.msra.mxu0 0
    %1141 = vmatprep.subr.bf16.mxu0 0
    %1142 = vmatpush1.bf16.msra.mxu0 0
    %1143 = vmatprep.subr.bf16.mxu0 0
    %1144 = vmatpush1.bf16.msra.mxu0 0
    %1145 = vmatprep.subr.bf16.mxu0 0
    %1146 = vmatpush1.bf16.msra.mxu0 0
    %1147 = vmatprep.subr.bf16.mxu0 0
    %1148 = vmatpush1.bf16.msra.mxu0 0
    %1149 = vmatprep.subr.bf16.mxu0 0
    %1150 = vmatpush1.bf16.msra.mxu0 0
    %1151 = vmatprep.subr.bf16.mxu0 0
    %1152 = vmatpush1.bf16.msra.mxu0 0
    %1153 = vmatprep.subr.bf16.mxu0 0
    %1154 = vmatpush1.bf16.msra.mxu0 0
    %1155 = vmatprep.mubr.bf16.mxu0 0
    %1156 = vmatmul.mubr.bf16.gmra.mrb[0].mxu0 %v910
    %v1157 = vpop.f32.mrb[0].mxu0
    %v1158 = vadd.f32 %v1045, %v1157
    %v1159 = vpop.f32.mrb[0].mxu0
    %v1160 = vpop.f32.mrb[0].mxu0
    %v1161 = vadd.f32 %v1048, %v1160
    %v1162 = vpop.f32.mrb[0].mxu0
    %1163 = vmatprep.mubr.bf16.mxu0 0
    %1164 = vmatmul.mubr.bf16.gmra.mrb[0].mxu0 %v911
    %v1165 = vpop.f32.mrb[0].mxu0
    %v1166 = vadd.f32 %v1053, %v1165
    %v1167 = vpop.f32.mrb[0].mxu0
    %v1168 = vpop.f32.mrb[0].mxu0
    %v1169 = vadd.f32 %v1056, %v1168
    %v1170 = vpop.f32.mrb[0].mxu0
    %1171 = vmatprep.mubr.bf16.mxu0 0
    %1172 = vmatmul.mubr.bf16.gmra.mrb[0].mxu0 %v912
    %v1173 = vpop.f32.mrb[0].mxu0
    %v1174 = vadd.f32 %v1061, %v1173
    %v1175 = vpop.f32.mrb[0].mxu0
    %v1176 = vpop.f32.mrb[0].mxu0
    %v1177 = vadd.f32 %v1064, %v1176
    %v1178 = vpop.f32.mrb[0].mxu0
    %1179 = vmatprep.mubr.bf16.mxu0 0
    %1180 = vmatmul.mubr.bf16.gmra.mrb[0].mxu0 %v913
    %v1181 = vpop.f32.mrb[0].mxu0
    %v1182 = vadd.f32 %v1069, %v1181
    %v1183 = vpop.f32.mrb[0].mxu0
    %v1184 = vpop.f32.mrb[0].mxu0
    %v1185 = vadd.f32 %v1072, %v1184
    %v1186 = vpop.f32.mrb[0].mxu0
    %1187 = vdwg.mxu0
    %v1188 = vld [vmem:[#allocation5 + $0x80] sm:$0xf]
    %v1189 = vld [vmem:[#allocation5 + $0x84] sm:$0xf]
    %v1190 = vld [vmem:[#allocation5 + $0x88] sm:$0xf]
    %v1191 = vld [vmem:[#allocation5 + $0x8c] sm:$0xf]
    %v1192 = vld [vmem:[#allocation5 + $0x90] sm:$0xf]
    %v1193 = vld [vmem:[#allocation5 + $0x94] sm:$0xf]
    %v1194 = vld [vmem:[#allocation5 + $0x98] sm:$0xf]
    %v1195 = vld [vmem:[#allocation5 + $0x9c] sm:$0xf]
    %v1196 = vld [vmem:[#allocation5 + $0xa0] sm:$0xf]
    %v1197 = vld [vmem:[#allocation5 + $0xa4] sm:$0xf]
    %v1198 = vld [vmem:[#allocation5 + $0xa8] sm:$0xf]
    %v1199 = vld [vmem:[#allocation5 + $0xac] sm:$0xf]
    %v1200 = vld [vmem:[#allocation5 + $0xb0] sm:$0xf]
    %v1201 = vld [vmem:[#allocation5 + $0xb4] sm:$0xf]
    %v1202 = vld [vmem:[#allocation5 + $0xb8] sm:$0xf]
    %v1203 = vld [vmem:[#allocation5 + $0xbc] sm:$0xf]
    %v1204 = vrot.slane %v910, 2
    %v1205 = vrot.slane %v911, 2
    %v1206 = vsel %vm755, %v1204, %v1205
    %v1207 = vrot.slane %v912, 2
    %v1208 = vsel %vm755, %v1205, %v1207
    %v1209 = vrot.slane %v913, 2
    %v1210 = vsel %vm755, %v1207, %v1209
    %v1211 = vsel %vm755, %v1209, %v763
    %v1232 = vunpack.c.l.b16 %v1188
    %v1233 = vunpack.c.l.b16 %v1189
    %v1234 = vunpack.c.l.b16 %v1190
    %v1235 = vunpack.c.l.b16 %v1191
    %v1236 = vunpack.c.l.b16 %v1192
    %v1237 = vunpack.c.l.b16 %v1193
    %v1238 = vunpack.c.l.b16 %v1194
    %v1239 = vunpack.c.l.b16 %v1195
    %v1240 = vunpack.c.l.b16 %v1196
    %v1241 = vunpack.c.l.b16 %v1197
    %v1242 = vunpack.c.l.b16 %v1198
    %v1243 = vunpack.c.l.b16 %v1199
    %v1244 = vunpack.c.l.b16 %v1200
    %v1245 = vunpack.c.l.b16 %v1201
    %v1246 = vunpack.c.l.b16 %v1202
    %v1247 = vunpack.c.l.b16 %v1203
    %v1248 = vpack.c.b16 %v1233, %v1232
    %v1249 = vpack.c.b16 %v1235, %v1234
    %v1250 = vpack.c.b16 %v1237, %v1236
    %v1251 = vpack.c.b16 %v1239, %v1238
    %v1252 = vpack.c.b16 %v1241, %v1240
    %v1253 = vpack.c.b16 %v1243, %v1242
    %v1254 = vpack.c.b16 %v1245, %v1244
    %v1255 = vpack.c.b16 %v1247, %v1246
    %1264 = vmatprep.subr.bf16.mxu0 0
    %1265 = vmatpush1.bf16.msra.mxu0 %v1248
    %1266 = vmatprep.subr.bf16.mxu0 0
    %1267 = vmatpush1.bf16.msra.mxu0 %v1249
    %1268 = vmatprep.subr.bf16.mxu0 0
    %1269 = vmatpush1.bf16.msra.mxu0 %v1250
    %1270 = vmatprep.subr.bf16.mxu0 0
    %1271 = vmatpush1.bf16.msra.mxu0 %v1251
    %1272 = vmatprep.subr.bf16.mxu0 0
    %1273 = vmatpush1.bf16.msra.mxu0 %v1252
    %1274 = vmatprep.subr.bf16.mxu0 0
    %1275 = vmatpush1.bf16.msra.mxu0 %v1253
    %1276 = vmatprep.subr.bf16.mxu0 0
    %1277 = vmatpush1.bf16.msra.mxu0 %v1254
    %1278 = vmatprep.subr.bf16.mxu0 0
    %1279 = vmatpush1.bf16.msra.mxu0 %v1255
    %1280 = vmatprep.subr.bf16.mxu0 0
    %1281 = vmatpush1.bf16.msra.mxu0 0
    %1282 = vmatprep.subr.bf16.mxu0 0
    %1283 = vmatpush1.bf16.msra.mxu0 0
    %1284 = vmatprep.subr.bf16.mxu0 0
    %1285 = vmatpush1.bf16.msra.mxu0 0
    %1286 = vmatprep.subr.bf16.mxu0 0
    %1287 = vmatpush1.bf16.msra.mxu0 0
    %1288 = vmatprep.subr.bf16.mxu0 0
    %1289 = vmatpush1.bf16.msra.mxu0 0
    %1290 = vmatprep.subr.bf16.mxu0 0
    %1291 = vmatpush1.bf16.msra.mxu0 0
    %1292 = vmatprep.subr.bf16.mxu0 0
    %1293 = vmatpush1.bf16.msra.mxu0 0
    %1294 = vmatprep.subr.bf16.mxu0 0
    %1295 = vmatpush1.bf16.msra.mxu0 0
    %1296 = vmatprep.mubr.bf16.mxu0 0
    %1297 = vmatmul.mubr.bf16.gmra.mrb[0].mxu0 %v1206
    %v1298 = vpop.f32.mrb[0].mxu0
    %v1299 = vadd.f32 0.0, %v1298
    %v1300 = vpop.f32.mrb[0].mxu0
    %v1301 = vpop.f32.mrb[0].mxu0
    %v1302 = vadd.f32 0.0, %v1301
    %v1303 = vpop.f32.mrb[0].mxu0
    %1304 = vmatprep.mubr.bf16.mxu0 0
    %1305 = vmatmul.mubr.bf16.gmra.mrb[0].mxu0 %v1208
    %v1306 = vpop.f32.mrb[0].mxu0
    %v1307 = vadd.f32 0.0, %v1306
    %v1308 = vpop.f32.mrb[0].mxu0
    %v1309 = vpop.f32.mrb[0].mxu0
    %v1310 = vadd.f32 0.0, %v1309
    %v1311 = vpop.f32.mrb[0].mxu0
    %1312 = vmatprep.mubr.bf16.mxu0 0
    %1313 = vmatmul.mubr.bf16.gmra.mrb[0].mxu0 %v1210
    %v1314 = vpop.f32.mrb[0].mxu0
    %v1315 = vadd.f32 0.0, %v1314
    %v1316 = vpop.f32.mrb[0].mxu0
    %v1317 = vpop.f32.mrb[0].mxu0
    %v1318 = vadd.f32 0.0, %v1317
    %v1319 = vpop.f32.mrb[0].mxu0
    %1320 = vmatprep.mubr.bf16.mxu0 0
    %1321 = vmatmul.mubr.bf16.gmra.mrb[0].mxu0 %v1211
    %v1322 = vpop.f32.mrb[0].mxu0
    %v1323 = vadd.f32 0.0, %v1322
    %v1324 = vpop.f32.mrb[0].mxu0
    %v1325 = vpop.f32.mrb[0].mxu0
    %v1326 = vadd.f32 0.0, %v1325
    %v1327 = vpop.f32.mrb[0].mxu0
    %1328 = vdwg.mxu0
    %v1329 = vadd.f32 %v1158, %v1299
    %v1330 = vadd.f32 %v1161, %v1302
    %v1331 = vadd.f32 %v1166, %v1307
    %v1332 = vadd.f32 %v1169, %v1310
    %v1333 = vadd.f32 %v1174, %v1315
    %v1334 = vadd.f32 %v1177, %v1318
    %v1335 = vadd.f32 %v1182, %v1323
    %v1336 = vadd.f32 %v1185, %v1326
    %v1337 = vld [vmem:[#allocation5 + $0xc0] sm:$0xf]
    %v1338 = vld [vmem:[#allocation5 + $0xc4] sm:$0xf]
    %v1339 = vld [vmem:[#allocation5 + $0xc8] sm:$0xf]
    %v1340 = vld [vmem:[#allocation5 + $0xcc] sm:$0xf]
    %v1341 = vld [vmem:[#allocation5 + $0xd0] sm:$0xf]
    %v1342 = vld [vmem:[#allocation5 + $0xd4] sm:$0xf]
    %v1343 = vld [vmem:[#allocation5 + $0xd8] sm:$0xf]
    %v1344 = vld [vmem:[#allocation5 + $0xdc] sm:$0xf]
    %v1345 = vld [vmem:[#allocation5 + $0xe0] sm:$0xf]
    %v1346 = vld [vmem:[#allocation5 + $0xe4] sm:$0xf]
    %v1347 = vld [vmem:[#allocation5 + $0xe8] sm:$0xf]
    %v1348 = vld [vmem:[#allocation5 + $0xec] sm:$0xf]
    %v1349 = vld [vmem:[#allocation5 + $0xf0] sm:$0xf]
    %v1350 = vld [vmem:[#allocation5 + $0xf4] sm:$0xf]
    %v1351 = vld [vmem:[#allocation5 + $0xf8] sm:$0xf]
    %v1352 = vld [vmem:[#allocation5 + $0xfc] sm:$0xf]
    %vm1353 = vcmask 1044480
    %v1354 = vrot.slane %v910, 3
    %v1355 = vrot.slane %v911, 3
    %v1356 = vsel %vm1353, %v1354, %v1355
    %v1357 = vrot.slane %v912, 3
    %v1358 = vsel %vm1353, %v1355, %v1357
    %v1359 = vrot.slane %v913, 3
    %v1360 = vsel %vm1353, %v1357, %v1359
    %v1361 = vrot.slane 0, 3
    %v1362 = vsel %vm1353, %v1359, %v1361
    %v1383 = vunpack.c.l.b16 %v1337
    %v1384 = vunpack.c.l.b16 %v1338
    %v1385 = vunpack.c.l.b16 %v1339
    %v1386 = vunpack.c.l.b16 %v1340
    %v1387 = vunpack.c.l.b16 %v1341
    %v1388 = vunpack.c.l.b16 %v1342
    %v1389 = vunpack.c.l.b16 %v1343
    %v1390 = vunpack.c.l.b16 %v1344
    %v1391 = vunpack.c.l.b16 %v1345
    %v1392 = vunpack.c.l.b16 %v1346
    %v1393 = vunpack.c.l.b16 %v1347
    %v1394 = vunpack.c.l.b16 %v1348
    %v1395 = vunpack.c.l.b16 %v1349
    %v1396 = vunpack.c.l.b16 %v1350
    %v1397 = vunpack.c.l.b16 %v1351
    %v1398 = vunpack.c.l.b16 %v1352
    %v1399 = vpack.c.b16 %v1384, %v1383
    %v1400 = vpack.c.b16 %v1386, %v1385
    %v1401 = vpack.c.b16 %v1388, %v1387
    %v1402 = vpack.c.b16 %v1390, %v1389
    %v1403 = vpack.c.b16 %v1392, %v1391
    %v1404 = vpack.c.b16 %v1394, %v1393
    %v1405 = vpack.c.b16 %v1396, %v1395
    %v1406 = vpack.c.b16 %v1398, %v1397
    %1415 = vmatprep.subr.bf16.mxu0 0
    %1416 = vmatpush1.bf16.msra.mxu0 %v1399
    %1417 = vmatprep.subr.bf16.mxu0 0
    %1418 = vmatpush1.bf16.msra.mxu0 %v1400
    %1419 = vmatprep.subr.bf16.mxu0 0
    %1420 = vmatpush1.bf16.msra.mxu0 %v1401
    %1421 = vmatprep.subr.bf16.mxu0 0
    %1422 = vmatpush1.bf16.msra.mxu0 %v1402
    %1423 = vmatprep.subr.bf16.mxu0 0
    %1424 = vmatpush1.bf16.msra.mxu0 %v1403
    %1425 = vmatprep.subr.bf16.mxu0 0
    %1426 = vmatpush1.bf16.msra.mxu0 %v1404
    %1427 = vmatprep.subr.bf16.mxu0 0
    %1428 = vmatpush1.bf16.msra.mxu0 %v1405
    %1429 = vmatprep.subr.bf16.mxu0 0
    %1430 = vmatpush1.bf16.msra.mxu0 %v1406
    %1431 = vmatprep.subr.bf16.mxu0 0
    %1432 = vmatpush1.bf16.msra.mxu0 0
    %1433 = vmatprep.subr.bf16.mxu0 0
    %1434 = vmatpush1.bf16.msra.mxu0 0
    %1435 = vmatprep.subr.bf16.mxu0 0
    %1436 = vmatpush1.bf16.msra.mxu0 0
    %1437 = vmatprep.subr.bf16.mxu0 0
    %1438 = vmatpush1.bf16.msra.mxu0 0
    %1439 = vmatprep.subr.bf16.mxu0 0
    %1440 = vmatpush1.bf16.msra.mxu0 0
    %1441 = vmatprep.subr.bf16.mxu0 0
    %1442 = vmatpush1.bf16.msra.mxu0 0
    %1443 = vmatprep.subr.bf16.mxu0 0
    %1444 = vmatpush1.bf16.msra.mxu0 0
    %1445 = vmatprep.subr.bf16.mxu0 0
    %1446 = vmatpush1.bf16.msra.mxu0 0
    %1447 = vmatprep.mubr.bf16.mxu0 0
    %1448 = vmatmul.mubr.bf16.gmra.mrb[0].mxu0 %v1356
    %v1449 = vpop.f32.mrb[0].mxu0
    %v1450 = vadd.f32 0.0, %v1449
    %v1451 = vpop.f32.mrb[0].mxu0
    %v1452 = vpop.f32.mrb[0].mxu0
    %v1453 = vadd.f32 0.0, %v1452
    %v1454 = vpop.f32.mrb[0].mxu0
    %1455 = vmatprep.mubr.bf16.mxu0 0
    %1456 = vmatmul.mubr.bf16.gmra.mrb[0].mxu0 %v1358
    %v1457 = vpop.f32.mrb[0].mxu0
    %v1458 = vadd.f32 0.0, %v1457
    %v1459 = vpop.f32.mrb[0].mxu0
    %v1460 = vpop.f32.mrb[0].mxu0
    %v1461 = vadd.f32 0.0, %v1460
    %v1462 = vpop.f32.mrb[0].mxu0
    %1463 = vmatprep.mubr.bf16.mxu0 0
    %1464 = vmatmul.mubr.bf16.gmra.mrb[0].mxu0 %v1360
    %v1465 = vpop.f32.mrb[0].mxu0
    %v1466 = vadd.f32 0.0, %v1465
    %v1467 = vpop.f32.mrb[0].mxu0
    %v1468 = vpop.f32.mrb[0].mxu0
    %v1469 = vadd.f32 0.0, %v1468
    %v1470 = vpop.f32.mrb[0].mxu0
    %1471 = vmatprep.mubr.bf16.mxu0 0
    %1472 = vmatmul.mubr.bf16.gmra.mrb[0].mxu0 %v1362
    %v1473 = vpop.f32.mrb[0].mxu0
    %v1474 = vadd.f32 0.0, %v1473
    %v1475 = vpop.f32.mrb[0].mxu0
    %v1476 = vpop.f32.mrb[0].mxu0
    %v1477 = vadd.f32 0.0, %v1476
    %v1478 = vpop.f32.mrb[0].mxu0
    %1479 = vdwg.mxu0
    %v1480 = vadd.f32 %v1329, %v1450
    %v1481 = vadd.f32 %v1330, %v1453
    %v1482 = vadd.f32 %v1331, %v1458
    %v1483 = vadd.f32 %v1332, %v1461
    %v1484 = vadd.f32 %v1333, %v1466
    %v1485 = vadd.f32 %v1334, %v1469
    %v1486 = vadd.f32 %v1335, %v1474
    %v1487 = vadd.f32 %v1336, %v1477
    %v1488 = vld [vmem:[#allocation5 + $0x100] sm:$0xf]
    %v1489 = vld [vmem:[#allocation5 + $0x104] sm:$0xf]
    %v1490 = vld [vmem:[#allocation5 + $0x108] sm:$0xf]
    %v1491 = vld [vmem:[#allocation5 + $0x10c] sm:$0xf]
    %v1492 = vld [vmem:[#allocation5 + $0x110] sm:$0xf]
    %v1493 = vld [vmem:[#allocation5 + $0x114] sm:$0xf]
    %v1494 = vld [vmem:[#allocation5 + $0x118] sm:$0xf]
    %v1495 = vld [vmem:[#allocation5 + $0x11c] sm:$0xf]
    %v1496 = vld [vmem:[#allocation5 + $0x120] sm:$0xf]
    %v1497 = vld [vmem:[#allocation5 + $0x124] sm:$0xf]
    %v1498 = vld [vmem:[#allocation5 + $0x128] sm:$0xf]
    %v1499 = vld [vmem:[#allocation5 + $0x12c] sm:$0xf]
    %v1500 = vld [vmem:[#allocation5 + $0x130] sm:$0xf]
    %v1501 = vld [vmem:[#allocation5 + $0x134] sm:$0xf]
    %v1502 = vld [vmem:[#allocation5 + $0x138] sm:$0xf]
    %v1503 = vld [vmem:[#allocation5 + $0x13c] sm:$0xf]
    %vm1504 = vcmask 1043456
    %v1505 = vrot.slane %v910, 4
    %v1506 = vrot.slane %v911, 4
    %v1507 = vsel %vm1504, %v1505, %v1506
    %v1508 = vrot.slane %v912, 4
    %v1509 = vsel %vm1504, %v1506, %v1508
    %v1510 = vrot.slane %v913, 4
    %v1511 = vsel %vm1504, %v1508, %v1510
    %v1512 = vrot.slane 0, 4
    %v1513 = vsel %vm1504, %v1510, %v1512
    %v1534 = vunpack.c.l.b16 %v1488
    %v1535 = vunpack.c.l.b16 %v1489
    %v1536 = vunpack.c.l.b16 %v1490
    %v1537 = vunpack.c.l.b16 %v1491
    %v1538 = vunpack.c.l.b16 %v1492
    %v1539 = vunpack.c.l.b16 %v1493
    %v1540 = vunpack.c.l.b16 %v1494
    %v1541 = vunpack.c.l.b16 %v1495
    %v1542 = vunpack.c.l.b16 %v1496
    %v1543 = vunpack.c.l.b16 %v1497
    %v1544 = vunpack.c.l.b16 %v1498
    %v1545 = vunpack.c.l.b16 %v1499
    %v1546 = vunpack.c.l.b16 %v1500
    %v1547 = vunpack.c.l.b16 %v1501
    %v1548 = vunpack.c.l.b16 %v1502
    %v1549 = vunpack.c.l.b16 %v1503
    %v1550 = vpack.c.b16 %v1535, %v1534
    %v1551 = vpack.c.b16 %v1537, %v1536
    %v1552 = vpack.c.b16 %v1539, %v1538
    %v1553 = vpack.c.b16 %v1541, %v1540
    %v1554 = vpack.c.b16 %v1543, %v1542
    %v1555 = vpack.c.b16 %v1545, %v1544
    %v1556 = vpack.c.b16 %v1547, %v1546
    %v1557 = vpack.c.b16 %v1549, %v1548
    %1566 = vmatprep.subr.bf16.mxu0 0
    %1567 = vmatpush1.bf16.msra.mxu0 %v1550
    %1568 = vmatprep.subr.bf16.mxu0 0
    %1569 = vmatpush1.bf16.msra.mxu0 %v1551
    %1570 = vmatprep.subr.bf16.mxu0 0
    %1571 = vmatpush1.bf16.msra.mxu0 %v1552
    %1572 = vmatprep.subr.bf16.mxu0 0
    %1573 = vmatpush1.bf16.msra.mxu0 %v1553
    %1574 = vmatprep.subr.bf16.mxu0 0
    %1575 = vmatpush1.bf16.msra.mxu0 %v1554
    %1576 = vmatprep.subr.bf16.mxu0 0
    %1577 = vmatpush1.bf16.msra.mxu0 %v1555
    %1578 = vmatprep.subr.bf16.mxu0 0
    %1579 = vmatpush1.bf16.msra.mxu0 %v1556
    %1580 = vmatprep.subr.bf16.mxu0 0
    %1581 = vmatpush1.bf16.msra.mxu0 %v1557
    %1582 = vmatprep.subr.bf16.mxu0 0
    %1583 = vmatpush1.bf16.msra.mxu0 0
    %1584 = vmatprep.subr.bf16.mxu0 0
    %1585 = vmatpush1.bf16.msra.mxu0 0
    %1586 = vmatprep.subr.bf16.mxu0 0
    %1587 = vmatpush1.bf16.msra.mxu0 0
    %1588 = vmatprep.subr.bf16.mxu0 0
    %1589 = vmatpush1.bf16.msra.mxu0 0
    %1590 = vmatprep.subr.bf16.mxu0 0
    %1591 = vmatpush1.bf16.msra.mxu0 0
    %1592 = vmatprep.subr.bf16.mxu0 0
    %1593 = vmatpush1.bf16.msra.mxu0 0
    %1594 = vmatprep.subr.bf16.mxu0 0
    %1595 = vmatpush1.bf16.msra.mxu0 0
    %1596 = vmatprep.subr.bf16.mxu0 0
    %1597 = vmatpush1.bf16.msra.mxu0 0
    %1598 = vmatprep.mubr.bf16.mxu0 0
    %1599 = vmatmul.mubr.bf16.gmra.mrb[0].mxu0 %v1507
    %v1600 = vpop.f32.mrb[0].mxu0
    %v1601 = vadd.f32 0.0, %v1600
    %v1602 = vpop.f32.mrb[0].mxu0
    %v1603 = vpop.f32.mrb[0].mxu0
    %v1604 = vadd.f32 0.0, %v1603
    %v1605 = vpop.f32.mrb[0].mxu0
    %1606 = vmatprep.mubr.bf16.mxu0 0
    %1607 = vmatmul.mubr.bf16.gmra.mrb[0].mxu0 %v1509
    %v1608 = vpop.f32.mrb[0].mxu0
    %v1609 = vadd.f32 0.0, %v1608
    %v1610 = vpop.f32.mrb[0].mxu0
    %v1611 = vpop.f32.mrb[0].mxu0
    %v1612 = vadd.f32 0.0, %v1611
    %v1613 = vpop.f32.mrb[0].mxu0
    %1614 = vmatprep.mubr.bf16.mxu0 0
    %1615 = vmatmul.mubr.bf16.gmra.mrb[0].mxu0 %v1511
    %v1616 = vpop.f32.mrb[0].mxu0
    %v1617 = vadd.f32 0.0, %v1616
    %v1618 = vpop.f32.mrb[0].mxu0
    %v1619 = vpop.f32.mrb[0].mxu0
    %v1620 = vadd.f32 0.0, %v1619
    %v1621 = vpop.f32.mrb[0].mxu0
    %1622 = vmatprep.mubr.bf16.mxu0 0
    %1623 = vmatmul.mubr.bf16.gmra.mrb[0].mxu0 %v1513
    %v1624 = vpop.f32.mrb[0].mxu0
    %v1625 = vadd.f32 0.0, %v1624
    %v1626 = vpop.f32.mrb[0].mxu0
    %v1627 = vpop.f32.mrb[0].mxu0
    %v1628 = vadd.f32 0.0, %v1627
    %v1629 = vpop.f32.mrb[0].mxu0
    %1630 = vdwg.mxu0
    %v1631 = vadd.f32 %v1480, %v1601
    %v1632 = vadd.f32 %v1481, %v1604
    %v1633 = vadd.f32 %v1482, %v1609
    %v1634 = vadd.f32 %v1483, %v1612
    %v1635 = vadd.f32 %v1484, %v1617
    %v1636 = vadd.f32 %v1485, %v1620
    %v1637 = vadd.f32 %v1486, %v1625
    %v1638 = vadd.f32 %v1487, %v1628
    %v1639 = vlaneseq
    %v1640 = vshrl.u32 %v1639, 7
    %v1641 = vsub.s32 0, %v1640
    %v1642 = vrot.slane %v87, %v1641
    %v1643 = vadd.f32 %v1631, %v1642
    %v1644 = vadd.f32 %v1632, %v1642
    %v1645 = vadd.f32 %v1633, %v1642
    %v1646 = vadd.f32 %v1634, %v1642
    %v1647 = vadd.f32 %v1635, %v1642
    %v1648 = vadd.f32 %v1636, %v1642
    %v1649 = vadd.f32 %v1637, %v1642
    %v1650 = vadd.f32 %v1638, %v1642
    %v1651 = vmax.f32 %v1643, 0.0
    %v1652 = vmax.f32 %v1644, 0.0
    %v1653 = vmax.f32 %v1645, 0.0
    %v1654 = vmax.f32 %v1646, 0.0
    %v1655 = vmax.f32 %v1647, 0.0
    %v1656 = vmax.f32 %v1648, 0.0
    %v1657 = vmax.f32 %v1649, 0.0
    %v1658 = vmax.f32 %v1650, 0.0
    %v1659 = vpack.c.bf16 %v1652, %v1651
    %v1660 = vpack.c.bf16 %v1654, %v1653
    %v1661 = vpack.c.bf16 %v1656, %v1655
    %v1662 = vpack.c.bf16 %v1658, %v1657
    %v1663 = vld [vmem:[%s3] sm:$0xf]
    %v1664 = vld [vmem:[%s3 + $0x4] sm:$0xf]
    %v1665 = vld [vmem:[%s3 + $0x8] sm:$0xf]
    %v1666 = vld [vmem:[%s3 + $0xc] sm:$0xf]
    %v1667 = vld [vmem:[%s3 + $0x10] sm:$0xf]
    %v1668 = vld [vmem:[%s3 + $0x14] sm:$0xf]
    %v1669 = vld [vmem:[%s3 + $0x18] sm:$0xf]
    %v1670 = vld [vmem:[%s3 + $0x1c] sm:$0xf]
    %v1671 = vld [vmem:[%s3 + $0x20] sm:$0xf]
    %v1672 = vld [vmem:[%s3 + $0x24] sm:$0xf]
    %v1673 = vld [vmem:[%s3 + $0x28] sm:$0xf]
    %v1674 = vld [vmem:[%s3 + $0x2c] sm:$0xf]
    %v1675 = vld [vmem:[%s3 + $0x30] sm:$0xf]
    %v1676 = vld [vmem:[%s3 + $0x34] sm:$0xf]
    %v1677 = vld [vmem:[%s3 + $0x38] sm:$0xf]
    %v1678 = vld [vmem:[%s3 + $0x3c] sm:$0xf]
    %v1679 = vlaneseq
    %v1680 = vshrl.u32 %v1679, 7
    %v1681 = vsub.s32 0, %v1680
    %v1682 = vrot.slane %v88, %v1681
    %v1699 = vunpack.c.l.b16 %v1663
    %v1700 = vunpack.c.l.b16 %v1664
    %v1701 = vunpack.c.l.b16 %v1665
    %v1702 = vunpack.c.l.b16 %v1666
    %v1703 = vunpack.c.l.b16 %v1667
    %v1704 = vunpack.c.l.b16 %v1668
    %v1705 = vunpack.c.l.b16 %v1669
    %v1706 = vunpack.c.l.b16 %v1670
    %v1707 = vunpack.c.l.b16 %v1671
    %v1708 = vunpack.c.l.b16 %v1672
    %v1709 = vunpack.c.l.b16 %v1673
    %v1710 = vunpack.c.l.b16 %v1674
    %v1711 = vunpack.c.l.b16 %v1675
    %v1712 = vunpack.c.l.b16 %v1676
    %v1713 = vunpack.c.l.b16 %v1677
    %v1714 = vunpack.c.l.b16 %v1678
    %v1715 = vpack.c.b16 %v1700, %v1699
    %v1716 = vpack.c.b16 %v1702, %v1701
    %v1717 = vpack.c.b16 %v1704, %v1703
    %v1718 = vpack.c.b16 %v1706, %v1705
    %v1719 = vpack.c.b16 %v1708, %v1707
    %v1720 = vpack.c.b16 %v1710, %v1709
    %v1721 = vpack.c.b16 %v1712, %v1711
    %v1722 = vpack.c.b16 %v1714, %v1713
    %1731 = vmatprep.subr.bf16.mxu0 0
    %1732 = vmatpush1.bf16.msra.mxu0 %v1715
    %1733 = vmatprep.subr.bf16.mxu0 0
    %1734 = vmatpush1.bf16.msra.mxu0 %v1716
    %1735 = vmatprep.subr.bf16.mxu0 0
    %1736 = vmatpush1.bf16.msra.mxu0 %v1717
    %1737 = vmatprep.subr.bf16.mxu0 0
    %1738 = vmatpush1.bf16.msra.mxu0 %v1718
    %1739 = vmatprep.subr.bf16.mxu0 0
    %1740 = vmatpush1.bf16.msra.mxu0 %v1719
    %1741 = vmatprep.subr.bf16.mxu0 0
    %1742 = vmatpush1.bf16.msra.mxu0 %v1720
    %1743 = vmatprep.subr.bf16.mxu0 0
    %1744 = vmatpush1.bf16.msra.mxu0 %v1721
    %1745 = vmatprep.subr.bf16.mxu0 0
    %1746 = vmatpush1.bf16.msra.mxu0 %v1722
    %1747 = vmatprep.subr.bf16.mxu0 0
    %1748 = vmatpush1.bf16.msra.mxu0 0
    %1749 = vmatprep.subr.bf16.mxu0 0
    %1750 = vmatpush1.bf16.msra.mxu0 0
    %1751 = vmatprep.subr.bf16.mxu0 0
    %1752 = vmatpush1.bf16.msra.mxu0 0
    %1753 = vmatprep.subr.bf16.mxu0 0
    %1754 = vmatpush1.bf16.msra.mxu0 0
    %1755 = vmatprep.subr.bf16.mxu0 0
    %1756 = vmatpush1.bf16.msra.mxu0 0
    %1757 = vmatprep.subr.bf16.mxu0 0
    %1758 = vmatpush1.bf16.msra.mxu0 0
    %1759 = vmatprep.subr.bf16.mxu0 0
    %1760 = vmatpush1.bf16.msra.mxu0 0
    %1761 = vmatprep.subr.bf16.mxu0 0
    %1762 = vmatpush1.bf16.msra.mxu0 0
    %1763 = vmatprep.mubr.bf16.mxu0 0
    %1764 = vmatmul.mubr.bf16.gmra.mrb[0].mxu0 %v1659
    %v1765 = vpop.f32.mrb[0].mxu0
    %v1766 = vadd.f32 %v1682, %v1765
    %v1767 = vpop.f32.mrb[0].mxu0
    %v1768 = vpop.f32.mrb[0].mxu0
    %v1769 = vadd.f32 %v1682, %v1768
    %v1770 = vpop.f32.mrb[0].mxu0
    %1771 = vmatprep.mubr.bf16.mxu0 0
    %1772 = vmatmul.mubr.bf16.gmra.mrb[0].mxu0 %v1660
    %v1773 = vpop.f32.mrb[0].mxu0
    %v1774 = vadd.f32 %v1682, %v1773
    %v1775 = vpop.f32.mrb[0].mxu0
    %v1776 = vpop.f32.mrb[0].mxu0
    %v1777 = vadd.f32 %v1682, %v1776
    %v1778 = vpop.f32.mrb[0].mxu0
    %1779 = vmatprep.mubr.bf16.mxu0 0
    %1780 = vmatmul.mubr.bf16.gmra.mrb[0].mxu0 %v1661
    %v1781 = vpop.f32.mrb[0].mxu0
    %v1782 = vadd.f32 %v1682, %v1781
    %v1783 = vpop.f32.mrb[0].mxu0
    %v1784 = vpop.f32.mrb[0].mxu0
    %v1785 = vadd.f32 %v1682, %v1784
    %v1786 = vpop.f32.mrb[0].mxu0
    %1787 = vmatprep.mubr.bf16.mxu0 0
    %1788 = vmatmul.mubr.bf16.gmra.mrb[0].mxu0 %v1662
    %v1789 = vpop.f32.mrb[0].mxu0
    %v1790 = vadd.f32 %v1682, %v1789
    %v1791 = vpop.f32.mrb[0].mxu0
    %v1792 = vpop.f32.mrb[0].mxu0
    %v1793 = vadd.f32 %v1682, %v1792
    %v1794 = vpop.f32.mrb[0].mxu0
    %1795 = vdwg.mxu0
    %v1796 = vmax.f32 %v1766, 0.0
    %v1797 = vmax.f32 %v1769, 0.0
    %v1798 = vmax.f32 %v1774, 0.0
    %v1799 = vmax.f32 %v1777, 0.0
    %v1800 = vmax.f32 %v1782, 0.0
    %v1801 = vmax.f32 %v1785, 0.0
    %v1802 = vmax.f32 %v1790, 0.0
    %v1803 = vmax.f32 %v1793, 0.0
    %v1804 = vmul.f32 %v1796, %v1796
    %v1805 = vmul.f32 %v1797, %v1797
    %v1806 = vmul.f32 %v1798, %v1798
    %v1807 = vmul.f32 %v1799, %v1799
    %v1808 = vmul.f32 %v1800, %v1800
    %v1809 = vmul.f32 %v1801, %v1801
    %v1810 = vmul.f32 %v1802, %v1802
    %v1811 = vmul.f32 %v1803, %v1803
    %vm1812 = vcmask 523264
    %v1814 = vsel %vm1812, %v92, 0
    %1816 = vmatprep.subr.mxu0 %v1804
    %1817 = vmatpush1.msra.mxu0 %v1796
    %1818 = vmatprep.subr.mxu0 %v1805
    %1819 = vmatpush1.msra.mxu0 %v1797
    %1820 = vmatprep.subr.mxu0 %v1806
    %1821 = vmatpush1.msra.mxu0 %v1798
    %1822 = vmatprep.subr.mxu0 %v1807
    %1823 = vmatpush1.msra.mxu0 %v1799
    %1824 = vmatprep.subr.mxu0 %v1808
    %1825 = vmatpush1.msra.mxu0 %v1800
    %1826 = vmatprep.subr.mxu0 %v1809
    %1827 = vmatpush1.msra.mxu0 %v1801
    %1828 = vmatprep.subr.mxu0 %v1810
    %1829 = vmatpush1.msra.mxu0 %v1802
    %1830 = vmatprep.subr.mxu0 %v1811
    %1831 = vmatpush1.msra.mxu0 %v1803
    %1832 = vmatprep.subr.mxu0 0.0
    %1833 = vmatpush1.msra.mxu0 0.0
    %1834 = vmatprep.subr.mxu0 0.0
    %1835 = vmatpush1.msra.mxu0 0.0
    %1836 = vmatprep.subr.mxu0 0.0
    %1837 = vmatpush1.msra.mxu0 0.0
    %1838 = vmatprep.subr.mxu0 0.0
    %1839 = vmatpush1.msra.mxu0 0.0
    %1840 = vmatprep.subr.mxu0 0.0
    %1841 = vmatpush1.msra.mxu0 0.0
    %1842 = vmatprep.subr.mxu0 0.0
    %1843 = vmatpush1.msra.mxu0 0.0
    %1844 = vmatprep.subr.mxu0 0.0
    %1845 = vmatpush1.msra.mxu0 0.0
    %1846 = vmatprep.subr.mxu0 0.0
    %1847 = vmatpush1.msra.mxu0 0.0
    %1848 = vmatprep.subr.mxu0 0.0
    %1849 = vmatpush1.msra.mxu0 0.0
    %1850 = vmatprep.subr.mxu0 0.0
    %1851 = vmatpush1.msra.mxu0 0.0
    %1852 = vmatprep.subr.mxu0 0.0
    %1853 = vmatpush1.msra.mxu0 0.0
    %1854 = vmatprep.subr.mxu0 0.0
    %1855 = vmatpush1.msra.mxu0 0.0
    %1856 = vmatprep.subr.mxu0 0.0
    %1857 = vmatpush1.msra.mxu0 0.0
    %1858 = vmatprep.subr.mxu0 0.0
    %1859 = vmatpush1.msra.mxu0 0.0
    %1860 = vmatprep.subr.mxu0 0.0
    %1861 = vmatpush1.msra.mxu0 0.0
    %1862 = vmatprep.subr.mxu0 0.0
    %1863 = vmatpush1.msra.mxu0 0.0
    %1864 = vmatprep.subr.mxu0 0.0
    %1865 = vmatpush1.msra.mxu0 0.0
    %1866 = vmatprep.subr.mxu0 0.0
    %1867 = vmatpush1.msra.mxu0 0.0
    %1868 = vmatprep.subr.mxu0 0.0
    %1869 = vmatpush1.msra.mxu0 0.0
    %1870 = vmatprep.subr.mxu0 0.0
    %1871 = vmatpush1.msra.mxu0 0.0
    %1872 = vmatprep.subr.mxu0 0.0
    %1873 = vmatpush1.msra.mxu0 0.0
    %1874 = vmatprep.subr.mxu0 0.0
    %1875 = vmatpush1.msra.mxu0 0.0
    %1876 = vmatprep.subr.mxu0 0.0
    %1877 = vmatpush1.msra.mxu0 0.0
    %1878 = vmatprep.subr.mxu0 0.0
    %1879 = vmatpush1.msra.mxu0 0.0
    %1880 = vmatprep.mubr.f32.mxu0 0.0
    %1881 = vmatmul.mubr.f32.gmra.mrb[0].mxu0 %v1814
    %v1882 = vpop.f32.mrb[0].mxu0
    %v1883 = vadd.f32 0.0, %v1882
    %v1884 = vpop.f32.mrb[0].mxu0
    %v1885 = vadd.f32 0.0, %v1884
    %1886 = vdwg.mxu0
    %v1887 = vmul.f32 %v1883, %v1883
    %v1888 = vsub.f32 %v1885, %v1887
    %v1889 = vmax.f32 %v1888, 0.0
    %v1890 = vmul.f32 %v1889, 1.0526316
    %v1891 = vrsqrt.pop %v1890
    %v1892 = vmul.f32 %v1890, %v1891
    %vm1893 = vcmp.eq.f32.partialorder %v1890, inf
    %v1894 = vsel %vm1893, %v1890, %v1892
    %vm1895 = vcmp.eq.f32.partialorder %v1890, 0.0
    %v1896 = vand.u32 %v1890, 2147483648
    %v1897 = vsel %vm1895, %v1896, %v1894
    %v1898 = vpack.c.bf16 %v1883, %v1883
    %v1899 = vpack.c.bf16 %v1897, %v1897
    %v1900 = vld [vmem:[%s4] sm:$0xf]
    %v1901 = vld [vmem:[%s4 + $0x4] sm:$0xf]
    %v1902 = vld [vmem:[%s4 + $0x8] sm:$0xf]
    %v1903 = vld [vmem:[%s4 + $0xc] sm:$0xf]
    %v1904 = vld [vmem:[%s4 + $0x10] sm:$0xf]
    %v1905 = vld [vmem:[%s4 + $0x14] sm:$0xf]
    %v1906 = vld [vmem:[%s4 + $0x18] sm:$0xf]
    %v1907 = vld [vmem:[%s4 + $0x1c] sm:$0xf]
    %v1908 = vld [vmem:[%s4 + $0x20] sm:$0xf]
    %v1909 = vld [vmem:[%s4 + $0x24] sm:$0xf]
    %v1910 = vld [vmem:[%s4 + $0x28] sm:$0xf]
    %v1911 = vld [vmem:[%s4 + $0x2c] sm:$0xf]
    %v1912 = vld [vmem:[%s4 + $0x30] sm:$0xf]
    %v1913 = vld [vmem:[%s4 + $0x34] sm:$0xf]
    %v1914 = vld [vmem:[%s4 + $0x38] sm:$0xf]
    %v1915 = vld [vmem:[%s4 + $0x3c] sm:$0xf]
    %v1916 = vld [vmem:[%s4 + $0x40] sm:$0xf]
    %v1917 = vld [vmem:[%s4 + $0x44] sm:$0xf]
    %v1918 = vld [vmem:[%s4 + $0x48] sm:$0xf]
    %v1919 = vld [vmem:[%s4 + $0x4c] sm:$0xf]
    %v1920 = vld [vmem:[%s4 + $0x50] sm:$0xf]
    %v1921 = vld [vmem:[%s4 + $0x54] sm:$0xf]
    %v1922 = vld [vmem:[%s4 + $0x58] sm:$0xf]
    %v1923 = vld [vmem:[%s4 + $0x5c] sm:$0xf]
    %v1924 = vld [vmem:[%s4 + $0x60] sm:$0xf]
    %v1925 = vld [vmem:[%s4 + $0x64] sm:$0xf]
    %v1926 = vld [vmem:[%s4 + $0x68] sm:$0xf]
    %v1927 = vld [vmem:[%s4 + $0x6c] sm:$0xf]
    %v1928 = vld [vmem:[%s4 + $0x70] sm:$0xf]
    %v1929 = vld [vmem:[%s4 + $0x74] sm:$0xf]
    %v1930 = vld [vmem:[%s4 + $0x78] sm:$0xf]
    %v1931 = vld [vmem:[%s4 + $0x7c] sm:$0xf]
    %v1932 = vlaneseq
    %v1933 = vshrl.u32 %v1932, 7
    %v1934 = vsub.s32 0, %v1933
    %v1935 = vrot.slane %v89, %v1934
    %v1968 = vunpack.c.l.b16 %v1900
    %v1969 = vunpack.c.l.b16 %v1901
    %v1970 = vunpack.c.l.b16 %v1902
    %v1971 = vunpack.c.l.b16 %v1903
    %v1972 = vunpack.c.l.b16 %v1904
    %v1973 = vunpack.c.l.b16 %v1905
    %v1974 = vunpack.c.l.b16 %v1906
    %v1975 = vunpack.c.l.b16 %v1907
    %v1976 = vunpack.c.l.b16 %v1908
    %v1977 = vunpack.c.l.b16 %v1909
    %v1978 = vunpack.c.l.b16 %v1910
    %v1979 = vunpack.c.l.b16 %v1911
    %v1980 = vunpack.c.l.b16 %v1912
    %v1981 = vunpack.c.l.b16 %v1913
    %v1982 = vunpack.c.l.b16 %v1914
    %v1983 = vunpack.c.l.b16 %v1915
    %v1984 = vunpack.c.l.b16 %v1916
    %v1985 = vunpack.c.l.b16 %v1917
    %v1986 = vunpack.c.l.b16 %v1918
    %v1987 = vunpack.c.l.b16 %v1919
    %v1988 = vunpack.c.l.b16 %v1920
    %v1989 = vunpack.c.l.b16 %v1921
    %v1990 = vunpack.c.l.b16 %v1922
    %v1991 = vunpack.c.l.b16 %v1923
    %v1992 = vunpack.c.l.b16 %v1924
    %v1993 = vunpack.c.l.b16 %v1925
    %v1994 = vunpack.c.l.b16 %v1926
    %v1995 = vunpack.c.l.b16 %v1927
    %v1996 = vunpack.c.l.b16 %v1928
    %v1997 = vunpack.c.l.b16 %v1929
    %v1998 = vunpack.c.l.b16 %v1930
    %v1999 = vunpack.c.l.b16 %v1931
    %v2000 = vpack.c.b16 %v1969, %v1968
    %v2001 = vpack.c.b16 %v1971, %v1970
    %v2002 = vpack.c.b16 %v1973, %v1972
    %v2003 = vpack.c.b16 %v1975, %v1974
    %v2004 = vpack.c.b16 %v1977, %v1976
    %v2005 = vpack.c.b16 %v1979, %v1978
    %v2006 = vpack.c.b16 %v1981, %v1980
    %v2007 = vpack.c.b16 %v1983, %v1982
    %v2008 = vpack.c.b16 %v1985, %v1984
    %v2009 = vpack.c.b16 %v1987, %v1986
    %v2010 = vpack.c.b16 %v1989, %v1988
    %v2011 = vpack.c.b16 %v1991, %v1990
    %v2012 = vpack.c.b16 %v1993, %v1992
    %v2013 = vpack.c.b16 %v1995, %v1994
    %v2014 = vpack.c.b16 %v1997, %v1996
    %v2015 = vpack.c.b16 %v1999, %v1998
    %2032 = vmatprep.subr.bf16.mxu0 0
    %2033 = vmatpush1.bf16.msra.mxu0 %v2000
    %2034 = vmatprep.subr.bf16.mxu0 0
    %2035 = vmatpush1.bf16.msra.mxu0 %v2001
    %2036 = vmatprep.subr.bf16.mxu0 0
    %2037 = vmatpush1.bf16.msra.mxu0 %v2002
    %2038 = vmatprep.subr.bf16.mxu0 0
    %2039 = vmatpush1.bf16.msra.mxu0 %v2003
    %2040 = vmatprep.subr.bf16.mxu0 0
    %2041 = vmatpush1.bf16.msra.mxu0 %v2004
    %2042 = vmatprep.subr.bf16.mxu0 0
    %2043 = vmatpush1.bf16.msra.mxu0 %v2005
    %2044 = vmatprep.subr.bf16.mxu0 0
    %2045 = vmatpush1.bf16.msra.mxu0 %v2006
    %2046 = vmatprep.subr.bf16.mxu0 0
    %2047 = vmatpush1.bf16.msra.mxu0 %v2007
    %2048 = vmatprep.subr.bf16.mxu0 0
    %2049 = vmatpush1.bf16.msra.mxu0 %v2008
    %2050 = vmatprep.subr.bf16.mxu0 0
    %2051 = vmatpush1.bf16.msra.mxu0 %v2009
    %2052 = vmatprep.subr.bf16.mxu0 0
    %2053 = vmatpush1.bf16.msra.mxu0 %v2010
    %2054 = vmatprep.subr.bf16.mxu0 0
    %2055 = vmatpush1.bf16.msra.mxu0 %v2011
    %2056 = vmatprep.subr.bf16.mxu0 0
    %2057 = vmatpush1.bf16.msra.mxu0 %v2012
    %2058 = vmatprep.subr.bf16.mxu0 0
    %2059 = vmatpush1.bf16.msra.mxu0 %v2013
    %2060 = vmatprep.subr.bf16.mxu0 0
    %2061 = vmatpush1.bf16.msra.mxu0 %v2014
    %2062 = vmatprep.subr.bf16.mxu0 0
    %2063 = vmatpush1.bf16.msra.mxu0 %v2015
    %2064 = vmatprep.mubr.bf16.mxu0 %v1899
    %2065 = vmatmul.mubr.bf16.gmra.mrb[0].mxu0 %v1898
    %v2066 = vpop.f32.mrb[0].mxu0
    %v2067 = vadd.f32 %v1935, %v2066
    %v2068 = vpop.f32.mrb[0].mxu0
    %v2069 = vpop.f32.mrb[0].mxu0
    %v2070 = vpop.f32.mrb[0].mxu0
    %2071 = vdwg.mxu0
    %v2072 = vmax.f32 %v2067, 0.0
    %v2073 = vpack.c.bf16 %v2072, %v2072
    %v2074 = vld [vmem:[#allocation7] sm:$0xf]
    %v2075 = vld [vmem:[#allocation7 + $0x4] sm:$0xf]
    %v2076 = vld [vmem:[#allocation7 + $0x8] sm:$0xf]
    %v2077 = vld [vmem:[#allocation7 + $0xc] sm:$0xf]
    %v2078 = vld [vmem:[#allocation7 + $0x10] sm:$0xf]
    %v2079 = vld [vmem:[#allocation7 + $0x14] sm:$0xf]
    %v2080 = vld [vmem:[#allocation7 + $0x18] sm:$0xf]
    %v2081 = vld [vmem:[#allocation7 + $0x1c] sm:$0xf]
    %v2082 = vld [vmem:[#allocation7 + $0x20] sm:$0xf]
    %v2083 = vld [vmem:[#allocation7 + $0x24] sm:$0xf]
    %v2084 = vld [vmem:[#allocation7 + $0x28] sm:$0xf]
    %v2085 = vld [vmem:[#allocation7 + $0x2c] sm:$0xf]
    %v2086 = vld [vmem:[#allocation7 + $0x30] sm:$0xf]
    %v2087 = vld [vmem:[#allocation7 + $0x34] sm:$0xf]
    %v2088 = vld [vmem:[#allocation7 + $0x38] sm:$0xf]
    %v2089 = vld [vmem:[#allocation7 + $0x3c] sm:$0xf]
    %v2090 = vlaneseq
    %v2091 = vshrl.u32 %v2090, 7
    %v2092 = vsub.s32 0, %v2091
    %v2093 = vrot.slane %v90, %v2092
    %v2110 = vunpack.c.l.b16 %v2074
    %v2111 = vunpack.c.l.b16 %v2075
    %v2112 = vunpack.c.l.b16 %v2076
    %v2113 = vunpack.c.l.b16 %v2077
    %v2114 = vunpack.c.l.b16 %v2078
    %v2115 = vunpack.c.l.b16 %v2079
    %v2116 = vunpack.c.l.b16 %v2080
    %v2117 = vunpack.c.l.b16 %v2081
    %v2118 = vunpack.c.l.b16 %v2082
    %v2119 = vunpack.c.l.b16 %v2083
    %v2120 = vunpack.c.l.b16 %v2084
    %v2121 = vunpack.c.l.b16 %v2085
    %v2122 = vunpack.c.l.b16 %v2086
    %v2123 = vunpack.c.l.b16 %v2087
    %v2124 = vunpack.c.l.b16 %v2088
    %v2125 = vunpack.c.l.b16 %v2089
    %v2126 = vpack.c.b16 %v2111, %v2110
    %v2127 = vpack.c.b16 %v2113, %v2112
    %v2128 = vpack.c.b16 %v2115, %v2114
    %v2129 = vpack.c.b16 %v2117, %v2116
    %v2130 = vpack.c.b16 %v2119, %v2118
    %v2131 = vpack.c.b16 %v2121, %v2120
    %v2132 = vpack.c.b16 %v2123, %v2122
    %v2133 = vpack.c.b16 %v2125, %v2124
    %2142 = vmatprep.subr.bf16.mxu0 0
    %2143 = vmatpush1.bf16.msra.mxu0 %v2126
    %2144 = vmatprep.subr.bf16.mxu0 0
    %2145 = vmatpush1.bf16.msra.mxu0 %v2127
    %2146 = vmatprep.subr.bf16.mxu0 0
    %2147 = vmatpush1.bf16.msra.mxu0 %v2128
    %2148 = vmatprep.subr.bf16.mxu0 0
    %2149 = vmatpush1.bf16.msra.mxu0 %v2129
    %2150 = vmatprep.subr.bf16.mxu0 0
    %2151 = vmatpush1.bf16.msra.mxu0 %v2130
    %2152 = vmatprep.subr.bf16.mxu0 0
    %2153 = vmatpush1.bf16.msra.mxu0 %v2131
    %2154 = vmatprep.subr.bf16.mxu0 0
    %2155 = vmatpush1.bf16.msra.mxu0 %v2132
    %2156 = vmatprep.subr.bf16.mxu0 0
    %2157 = vmatpush1.bf16.msra.mxu0 %v2133
    %2158 = vmatprep.subr.bf16.mxu0 0
    %2159 = vmatpush1.bf16.msra.mxu0 0
    %2160 = vmatprep.subr.bf16.mxu0 0
    %2161 = vmatpush1.bf16.msra.mxu0 0
    %2162 = vmatprep.subr.bf16.mxu0 0
    %2163 = vmatpush1.bf16.msra.mxu0 0
    %2164 = vmatprep.subr.bf16.mxu0 0
    %2165 = vmatpush1.bf16.msra.mxu0 0
    %2166 = vmatprep.subr.bf16.mxu0 0
    %2167 = vmatpush1.bf16.msra.mxu0 0
    %2168 = vmatprep.subr.bf16.mxu0 0
    %2169 = vmatpush1.bf16.msra.mxu0 0
    %2170 = vmatprep.subr.bf16.mxu0 0
    %2171 = vmatpush1.bf16.msra.mxu0 0
    %2172 = vmatprep.subr.bf16.mxu0 0
    %2173 = vmatpush1.bf16.msra.mxu0 0
    %2174 = vmatprep.mubr.bf16.mxu0 0
    %2175 = vmatmul.mubr.bf16.gmra.mrb[0].mxu0 %v2073
    %v2176 = vpop.f32.mrb[0].mxu0
    %v2177 = vadd.f32 %v2093, %v2176
    %v2178 = vpop.f32.mrb[0].mxu0
    %v2179 = vpop.f32.mrb[0].mxu0
    %v2180 = vpop.f32.mrb[0].mxu0
    %2181 = vdwg.mxu0
    %v2182 = vmax.f32 %v2177, 0.0
    %v2183 = vpack.c.bf16 %v2182, %v2182
    %v2184 = vld [vmem:[#allocation8] sm:$0xf]
    %v2185 = vld [vmem:[#allocation8 + $0x4] sm:$0xf]
    %v2186 = vld [vmem:[#allocation8 + $0x8] sm:$0xf]
    %v2187 = vld [vmem:[#allocation8 + $0xc] sm:$0xf]
    %v2188 = vld [vmem:[#allocation8 + $0x10] sm:$0xf]
    %v2189 = vld [vmem:[#allocation8 + $0x14] sm:$0xf]
    %v2190 = vld [vmem:[#allocation8 + $0x18] sm:$0xf]
    %v2191 = vld [vmem:[#allocation8 + $0x1c] sm:$0xf]
    %v2192 = vld [vmem:[#allocation8 + $0x20] sm:$0xf]
    %v2193 = vld [vmem:[#allocation8 + $0x24] sm:$0xf]
    %v2194 = vld [vmem:[#allocation8 + $0x28] sm:$0xf]
    %v2195 = vld [vmem:[#allocation8 + $0x2c] sm:$0xf]
    %v2196 = vld [vmem:[#allocation8 + $0x30] sm:$0xf]
    %v2197 = vld [vmem:[#allocation8 + $0x34] sm:$0xf]
    %v2198 = vld [vmem:[#allocation8 + $0x38] sm:$0xf]
    %v2199 = vld [vmem:[#allocation8 + $0x3c] sm:$0xf]
    %v2200 = vlaneseq
    %v2201 = vshrl.u32 %v2200, 7
    %v2202 = vsub.s32 0, %v2201
    %v2203 = vrot.slane %v91, %v2202
    %v2220 = vunpack.c.l.b16 %v2184
    %v2221 = vunpack.c.l.b16 %v2185
    %v2222 = vunpack.c.l.b16 %v2186
    %v2223 = vunpack.c.l.b16 %v2187
    %v2224 = vunpack.c.l.b16 %v2188
    %v2225 = vunpack.c.l.b16 %v2189
    %v2226 = vunpack.c.l.b16 %v2190
    %v2227 = vunpack.c.l.b16 %v2191
    %v2228 = vunpack.c.l.b16 %v2192
    %v2229 = vunpack.c.l.b16 %v2193
    %v2230 = vunpack.c.l.b16 %v2194
    %v2231 = vunpack.c.l.b16 %v2195
    %v2232 = vunpack.c.l.b16 %v2196
    %v2233 = vunpack.c.l.b16 %v2197
    %v2234 = vunpack.c.l.b16 %v2198
    %v2235 = vunpack.c.l.b16 %v2199
    %v2236 = vpack.c.b16 %v2221, %v2220
    %v2237 = vpack.c.b16 %v2223, %v2222
    %v2238 = vpack.c.b16 %v2225, %v2224
    %v2239 = vpack.c.b16 %v2227, %v2226
    %v2240 = vpack.c.b16 %v2229, %v2228
    %v2241 = vpack.c.b16 %v2231, %v2230
    %v2242 = vpack.c.b16 %v2233, %v2232
    %v2243 = vpack.c.b16 %v2235, %v2234
    %2252 = vmatprep.subr.bf16.mxu0 0
    %2253 = vmatpush1.bf16.msra.mxu0 %v2236
    %2254 = vmatprep.subr.bf16.mxu0 0
    %2255 = vmatpush1.bf16.msra.mxu0 %v2237
    %2256 = vmatprep.subr.bf16.mxu0 0
    %2257 = vmatpush1.bf16.msra.mxu0 %v2238
    %2258 = vmatprep.subr.bf16.mxu0 0
    %2259 = vmatpush1.bf16.msra.mxu0 %v2239
    %2260 = vmatprep.subr.bf16.mxu0 0
    %2261 = vmatpush1.bf16.msra.mxu0 %v2240
    %2262 = vmatprep.subr.bf16.mxu0 0
    %2263 = vmatpush1.bf16.msra.mxu0 %v2241
    %2264 = vmatprep.subr.bf16.mxu0 0
    %2265 = vmatpush1.bf16.msra.mxu0 %v2242
    %2266 = vmatprep.subr.bf16.mxu0 0
    %2267 = vmatpush1.bf16.msra.mxu0 %v2243
    %2268 = vmatprep.subr.bf16.mxu0 0
    %2269 = vmatpush1.bf16.msra.mxu0 0
    %2270 = vmatprep.subr.bf16.mxu0 0
    %2271 = vmatpush1.bf16.msra.mxu0 0
    %2272 = vmatprep.subr.bf16.mxu0 0
    %2273 = vmatpush1.bf16.msra.mxu0 0
    %2274 = vmatprep.subr.bf16.mxu0 0
    %2275 = vmatpush1.bf16.msra.mxu0 0
    %2276 = vmatprep.subr.bf16.mxu0 0
    %2277 = vmatpush1.bf16.msra.mxu0 0
    %2278 = vmatprep.subr.bf16.mxu0 0
    %2279 = vmatpush1.bf16.msra.mxu0 0
    %2280 = vmatprep.subr.bf16.mxu0 0
    %2281 = vmatpush1.bf16.msra.mxu0 0
    %2282 = vmatprep.subr.bf16.mxu0 0
    %2283 = vmatpush1.bf16.msra.mxu0 0
    %2284 = vmatprep.mubr.bf16.mxu0 0
    %2285 = vmatmul.mubr.bf16.gmra.mrb[0].mxu0 %v2183
    %v2286 = vpop.f32.mrb[0].mxu0
    %v2287 = vadd.f32 %v2203, %v2286
    %v2288 = vpop.f32.mrb[0].mxu0
    %v2289 = vpop.f32.mrb[0].mxu0
    %v2290 = vpop.f32.mrb[0].mxu0
    %2291 = vdwg.mxu0
    %2292 = vst [vmem:[#allocation10] sm:$0x3] %v2287
    // Predicated region
    $region50: #{simple_tdnn_forward.1} parent=1 // pred_check
      _
    $region51: #{simple_tdnn_forward.1} parent=1 // pred_check_branch
      %2294 = sbr.rel (0) target = $region53
    $region52: #{simple_tdnn_forward.1} parent=1 // pred_region
      %s2296 = ssub.s32 32, 32
      %2297 = vsyncadd [#allocation4], %s2296
      %s2299 = sshll.u32 [#allocation10], 4
      %s2300 = int_to_ptr.vmem [resolvable:$true] %s2299
      %2302 = dma.vmem_to_hbm [thread:$0]  %s2300, 32, %s8, [#allocation4]
    $region53: #{simple_tdnn_forward.1} parent=1 // pred_fallthru
      _
    // Predicated region
    $region54: #{simple_tdnn_forward.1} parent=1 // pred_check
      _
    $region55: #{simple_tdnn_forward.1} parent=1 // pred_check_branch
      %2304 = sbr.rel (0) target = $region57
    $region56: #{simple_tdnn_forward.1} parent=1 // pred_region
      %2305 = dma.done [#allocation4], 32
    $region57: #{simple_tdnn_forward.1} parent=1 // pred_fallthru
      _
    %2306 = vsyncpa [#allocation3], 1
    %2307 = vsyncpa [#allocation6], 1
    %2308 = vsyncpa [#allocation9], 1
    %2309 = vsyncpa [#allocation4], 1

</llo_original>
